<compile_context>
chip_gen: v5e
topology: v5e:2x2
jax: 0.10.0
libtpu: 0.0.40
codegen_flags: <defaults>
</compile_context>

<pallas_src>
import functools

import jax
import jax.numpy as jnp
from jax.experimental import pallas as pl
from jax.experimental.pallas import tpu as pltpu


def _round_up(x, m):
    return (x + m - 1) // m * m


# ----------------------------------------------------------------------------
# Kernel 1a: tiled conv-as-matmul + fused LeakyReLU (stage without BatchNorm)
#   grid = (M_tiles, K_tiles); K (reduction) last/"arbitrary", M "parallel".
# ----------------------------------------------------------------------------
def _conv_lrelu_kernel(p_ref, w_ref, y_ref, acc_ref):
    k = pl.program_id(1)

    @pl.when(k == 0)
    def _():
        acc_ref[...] = jnp.zeros_like(acc_ref)

    acc_ref[...] += jnp.dot(p_ref[...], w_ref[...],
                            preferred_element_type=jnp.float32)

    @pl.when(k == pl.num_programs(1) - 1)
    def _():
        acc = acc_ref[...]
        y_ref[...] = jnp.where(acc > 0.0, acc, 0.2 * acc)


# ----------------------------------------------------------------------------
# Kernel 1b: tiled conv-as-matmul + per-tile BN partial statistics.
#   Emits the raw conv output plus an (8, Cp) stats block per M-tile:
#   row 0 = per-channel sum, row 1 = per-channel sum of squares.
# ----------------------------------------------------------------------------
def _conv_stats_kernel(p_ref, w_ref, y_ref, stats_ref, acc_ref):
    k = pl.program_id(1)

    @pl.when(k == 0)
    def _():
        acc_ref[...] = jnp.zeros_like(acc_ref)

    acc_ref[...] += jnp.dot(p_ref[...], w_ref[...],
                            preferred_element_type=jnp.float32)

    @pl.when(k == pl.num_programs(1) - 1)
    def _():
        acc = acc_ref[...]
        y_ref[...] = acc
        c = acc.shape[1]
        s = jnp.sum(acc, axis=0, keepdims=True)            # (1, Cp)
        sq = jnp.sum(acc * acc, axis=0, keepdims=True)     # (1, Cp)
        row = jax.lax.broadcasted_iota(jnp.int32, (8, c), 0)
        stats = jnp.where(row == 0, jnp.broadcast_to(s, (8, c)),
                          jnp.where(row == 1, jnp.broadcast_to(sq, (8, c)),
                                    0.0))
        stats_ref[...] = stats


# ----------------------------------------------------------------------------
# Kernel 2: BatchNorm apply (precomputed per-channel scale/shift) + LeakyReLU
# ----------------------------------------------------------------------------
def _bn_lrelu_kernel(y_ref, scale_ref, shift_ref, o_ref):
    y = y_ref[...] * scale_ref[...] + shift_ref[...]
    o_ref[...] = jnp.where(y > 0.0, y, 0.2 * y)


# ----------------------------------------------------------------------------
# im2col (4x4 patches, stride 2, pad 1) -> (N*Ho*Wo, k*k*C)
# ----------------------------------------------------------------------------
def _im2col(x_nhwc, k=4, s=2, p=1):
    N, H, W, C = x_nhwc.shape
    xp = jnp.pad(x_nhwc, ((0, 0), (p, p), (p, p), (0, 0)))
    Ho = (H + 2 * p - k) // s + 1
    Wo = (W + 2 * p - k) // s + 1
    slices = []
    for i in range(k):
        for j in range(k):
            slices.append(xp[:, i:i + s * Ho:s, j:j + s * Wo:s, :])
    patches = jnp.stack(slices, axis=-2)                 # (N, Ho, Wo, k*k, C)
    return patches.reshape(N * Ho * Wo, k * k * C), (N, Ho, Wo)


# ----------------------------------------------------------------------------
# One discriminator stage. x: NHWC f32, w: PyTorch OIHW f32. Returns NHWC f32.
# ----------------------------------------------------------------------------
def fused_conv_bn_lrelu(x_nhwc, w_oihw, gamma, beta, *, use_bn,
                        tile_m=512, tile_k=512):
    Cout, Cin, kh, kw = w_oihw.shape
    # bf16 operands for the MXU (accumulation stays f32 in the kernel).
    patches, (N, Ho, Wo) = _im2col(x_nhwc.astype(jnp.bfloat16), k=kh, s=2, p=1)
    M, K = patches.shape
    w_flat = jnp.transpose(w_oihw, (2, 3, 1, 0)).reshape(kh * kw * Cin, Cout)
    w_flat = w_flat.astype(jnp.bfloat16)

    # Lane/sublane-aligned padded shapes and tile sizes.
    Cp = _round_up(Cout, 128)
    tm = min(tile_m, _round_up(M, 8))
    Mp = _round_up(M, tm)
    tk = min(tile_k, _round_up(K, 128))
    Kp = _round_up(K, tk)
    m_tiles, k_tiles = Mp // tm, Kp // tk

    patches_p = jnp.pad(patches, ((0, Mp - M), (0, Kp - K)))
    w_p = jnp.pad(w_flat, ((0, Kp - K), (0, Cp - Cout)))

    conv_in_specs = [
        pl.BlockSpec((tm, tk), lambda i, k: (i, k)),
        pl.BlockSpec((tk, Cp), lambda i, k: (k, 0)),
    ]
    y_spec = pl.BlockSpec((tm, Cp), lambda i, k: (i, 0))
    conv_params = pltpu.CompilerParams(
        dimension_semantics=("parallel", "arbitrary"),
        vmem_limit_bytes=32 * 1024 * 1024)
    cost = pl.CostEstimate(
        flops=2 * Mp * Kp * Cp,
        transcendentals=0,
        bytes_accessed=Mp * Kp * 2 + Kp * Cp * 2 + Mp * Cp * 4)

    if not use_bn:
        out = pl.pallas_call(
            _conv_lrelu_kernel,
            out_shape=jax.ShapeDtypeStruct((Mp, Cp), jnp.float32),
            grid=(m_tiles, k_tiles),
            in_specs=conv_in_specs,
            out_specs=y_spec,
            scratch_shapes=[pltpu.VMEM((tm, Cp), jnp.float32)],
            compiler_params=conv_params,
            cost_estimate=cost,
        )(patches_p, w_p)
    else:
        # Pass 1: conv + per-tile partial sums / sums-of-squares.
        y, stats = pl.pallas_call(
            _conv_stats_kernel,
            out_shape=(jax.ShapeDtypeStruct((Mp, Cp), jnp.float32),
                       jax.ShapeDtypeStruct((m_tiles * 8, Cp), jnp.float32)),
            grid=(m_tiles, k_tiles),
            in_specs=conv_in_specs,
            out_specs=(y_spec,
                       pl.BlockSpec((8, Cp), lambda i, k: (i, 0))),
            scratch_shapes=[pltpu.VMEM((tm, Cp), jnp.float32)],
            compiler_params=conv_params,
            cost_estimate=cost,
        )(patches_p, w_p)

        # Tiny cross-tile reduction (Cp channels) -> BN scale/shift.
        # Zero-padded rows contribute nothing to the sums; divide by true M.
        stats = stats.reshape(m_tiles, 8, Cp)
        total = jnp.sum(stats[:, 0, :], axis=0)
        total_sq = jnp.sum(stats[:, 1, :], axis=0)
        mean = total / M
        var = jnp.maximum(total_sq / M - mean * mean, 0.0)   # biased variance
        inv = jax.lax.rsqrt(var + 1e-5)
        gamma_p = jnp.pad(gamma, (0, Cp - Cout))
        beta_p = jnp.pad(beta, (0, Cp - Cout))
        scale = (gamma_p * inv).reshape(1, Cp)
        shift = (beta_p - mean * gamma_p * inv).reshape(1, Cp)

        # Pass 2: lane-dense elementwise BN apply + LeakyReLU.
        out = pl.pallas_call(
            _bn_lrelu_kernel,
            out_shape=jax.ShapeDtypeStruct((Mp, Cp), jnp.float32),
            grid=(m_tiles,),
            in_specs=[pl.BlockSpec((tm, Cp), lambda i: (i, 0)),
                      pl.BlockSpec((1, Cp), lambda i: (0, 0)),
                      pl.BlockSpec((1, Cp), lambda i: (0, 0))],
            out_specs=pl.BlockSpec((tm, Cp), lambda i: (i, 0)),
            compiler_params=pltpu.CompilerParams(
                dimension_semantics=("parallel",),
                vmem_limit_bytes=32 * 1024 * 1024),
        )(out if False else y, scale, shift)

    return out[:M, :Cout].reshape(N, Ho, Wo, Cout)


# ----------------------------------------------------------------------------
# D_NET64 (forward = img_code_s16) parameters + forward
# ----------------------------------------------------------------------------
def init_d_net64_params(key, ndf):
    channels = [(3, ndf), (ndf, 2 * ndf), (2 * ndf, 4 * ndf), (4 * ndf, 8 * ndf)]
    params = []
    for (cin, cout) in channels:
        key, kw_, kg, kb = jax.random.split(key, 4)
        w = 0.02 * jax.random.normal(kw_, (cout, cin, 4, 4), jnp.float32)  # OIHW
        gamma = 1.0 + 0.1 * jax.random.normal(kg, (cout,), jnp.float32)
        beta = 0.1 * jax.random.normal(kb, (cout,), jnp.float32)
        params.append((w, gamma, beta))
    return params


@jax.jit
def d_net64_forward(x_nchw, params):
    """Returns x_code4 in NCHW, matching the PyTorch module output layout."""
    x = jnp.transpose(x_nchw, (0, 2, 3, 1))  # NCHW -> NHWC
    for layer_idx, (w, gamma, beta) in enumerate(params):
        use_bn = layer_idx > 0               # first stage has no BatchNorm
        x = fused_conv_bn_lrelu(x, w, gamma, beta, use_bn=use_bn)
    return jnp.transpose(x, (0, 3, 1, 2))    # NHWC -> NCHW


# ----------------------------------------------------------------------------
# Pure-JAX reference (lax.conv, same bf16-operand / f32-accum numerics)
# ----------------------------------------------------------------------------
def _reference_forward(x_nchw, params):
    x = x_nchw
    for layer_idx, (w, gamma, beta) in enumerate(params):
        x = jax.lax.conv_general_dilated(
            x.astype(jnp.bfloat16), w.astype(jnp.bfloat16),
            window_strides=(2, 2), padding=((1, 1), (1, 1)),
            dimension_numbers=("NCHW", "OIHW", "NCHW"),
            preferred_element_type=jnp.float32)
        if layer_idx > 0:
            mean = jnp.mean(x, axis=(0, 2, 3), keepdims=True)
            var = jnp.mean((x - mean) ** 2, axis=(0, 2, 3), keepdims=True)
            x = (x - mean) * jax.lax.rsqrt(var + 1e-5)
            x = x * gamma.reshape(1, -1, 1, 1) + beta.reshape(1, -1, 1, 1)
        x = jnp.where(x > 0.0, x, 0.2 * x)
    return x


if __name__ == "__main__":
    # Small, forward-consistent config: ndf (cfg.GAN.DF_DIM) = 8, 16x16 image.
    ndf = 8
    N, H, W = 2, 16, 16

    key = jax.random.PRNGKey(0)
    key, kx = jax.random.split(key)
    x = jax.random.normal(kx, (N, 3, H, W), jnp.float32)   # NCHW like PyTorch

    params = init_d_net64_params(key, ndf)

    out = jax.block_until_ready(d_net64_forward(x, params))
    assert out.shape == (N, 8 * ndf, H // 16, W // 16), out.shape

    ref = jax.block_until_ready(_reference_forward(x, params))
    max_err = float(jnp.max(jnp.abs(out - ref)))
    assert jnp.allclose(out, ref, rtol=2e-2, atol=2e-2), max_err

    print("KERNEL_OK")
</pallas_src>

<mosaic_0001>
module attributes {stable_mosaic.version = 11 : i64} {
  func.func @_conv_lrelu_kernel(%arg0: i32, %arg1: i32, %arg2: memref<128x128xbf16, #tpu.memory_space<vmem>>, %arg3: memref<128x128xbf16, #tpu.memory_space<vmem>>, %arg4: memref<128x128xf32, #tpu.memory_space<vmem>>, %arg5: memref<128x128xf32, #tpu.memory_space<vmem>>) attributes {dimension_semantics = [#tpu.dimension_semantics<parallel>, #tpu.dimension_semantics<arbitrary>], iteration_bounds = array<i64: 1, 1>, scalar_prefetch = 0 : i64, scratch_operands = 1 : i64, tpu.core_type = #tpu.core_type<tc>, window_params = [{transform_indices = @transform_0, window_bounds = array<i64: 128, 128>}, {transform_indices = @transform_1, window_bounds = array<i64: 128, 128>}, {transform_indices = @transform_2, window_bounds = array<i64: 128, 128>}]} {
    %c0_i32 = arith.constant 0 : i32
    %0 = arith.cmpi eq, %arg1, %c0_i32 : i32
    %1 = arith.extui %0 : i1 to i32
    %c0_i32_0 = arith.constant 0 : i32
    %2 = arith.cmpi ne, %1, %c0_i32_0 : i32
    scf.if %2 {
      %cst_10 = arith.constant 0.000000e+00 : f32
      %12 = vector.broadcast %cst_10 : f32 to vector<128x128xf32>
      %c0_11 = arith.constant 0 : index
      %c0_12 = arith.constant 0 : index
      %13 = vector.load %arg5[%c0_11, %c0_12] : memref<128x128xf32, #tpu.memory_space<vmem>>, vector<128x128xf32>
      tpu.vector_store %arg5[%c0_11, %c0_12], %12 {strides = array<i32>} : memref<128x128xf32, #tpu.memory_space<vmem>>, vector<128x128xf32>,
    } else {
    }
    %c0 = arith.constant 0 : index
    %c0_1 = arith.constant 0 : index
    %3 = vector.load %arg5[%c0, %c0_1] : memref<128x128xf32, #tpu.memory_space<vmem>>, vector<128x128xf32>
    %c0_2 = arith.constant 0 : index
    %c0_3 = arith.constant 0 : index
    %4 = vector.load %arg2[%c0_2, %c0_3] : memref<128x128xbf16, #tpu.memory_space<vmem>>, vector<128x128xbf16>
    %c0_4 = arith.constant 0 : index
    %c0_5 = arith.constant 0 : index
    %5 = vector.load %arg3[%c0_4, %c0_5] : memref<128x128xbf16, #tpu.memory_space<vmem>>, vector<128x128xbf16>
    %cst = arith.constant dense<0.000000e+00> : vector<128x128xf32>
    %6 = tpu.matmul %4, %5, %cst {dimension_numbers = #tpu.dot_dimension_numbers<[1], [0], [0], [1], [0, 0, 1, 1], [], []>} : vector<128x128xbf16>, vector<128x128xbf16>, vector<128x128xf32> -> vector<128x128xf32>
    %7 = arith.addf %3, %6 : vector<128x128xf32>
    %c0_6 = arith.constant 0 : index
    %c0_7 = arith.constant 0 : index
    %8 = vector.load %arg5[%c0_6, %c0_7] : memref<128x128xf32, #tpu.memory_space<vmem>>, vector<128x128xf32>
    tpu.vector_store %arg5[%c0_6, %c0_7], %7 {strides = array<i32>} : memref<128x128xf32, #tpu.memory_space<vmem>>, vector<128x128xf32>,
    %c0_i32_8 = arith.constant 0 : i32
    %9 = arith.cmpi eq, %arg1, %c0_i32_8 : i32
    %10 = arith.extui %9 : i1 to i32
    %c0_i32_9 = arith.constant 0 : i32
    %11 = arith.cmpi ne, %10, %c0_i32_9 : i32
    scf.if %11 {
      %c0_10 = arith.constant 0 : index
      %c0_11 = arith.constant 0 : index
      %12 = vector.load %arg5[%c0_10, %c0_11] : memref<128x128xf32, #tpu.memory_space<vmem>>, vector<128x128xf32>
      %cst_12 = arith.constant 0.000000e+00 : f32
      %13 = vector.broadcast %cst_12 : f32 to vector<128x128xf32>
      %14 = arith.cmpf ogt, %12, %13 : vector<128x128xf32>
      %cst_13 = arith.constant 2.000000e-01 : f32
      %15 = vector.broadcast %cst_13 : f32 to vector<128x128xf32>
      %16 = arith.mulf %15, %12 : vector<128x128xf32>
      %17 = arith.select %14, %12, %16 : vector<128x128xi1>, vector<128x128xf32>
      %c0_14 = arith.constant 0 : index
      %c0_15 = arith.constant 0 : index
      %18 = vector.load %arg4[%c0_14, %c0_15] : memref<128x128xf32, #tpu.memory_space<vmem>>, vector<128x128xf32>
      tpu.vector_store %arg4[%c0_14, %c0_15], %17 {strides = array<i32>} : memref<128x128xf32, #tpu.memory_space<vmem>>, vector<128x128xf32>,
    } else {
    }
    return
  }
  func.func @transform_0(%arg0: i32, %arg1: i32) -> (i32, i32) {
    %c0_i32 = arith.constant 0 : i32
    return %arg0, %arg1 : i32, i32
  }
  func.func @transform_1(%arg0: i32, %arg1: i32) -> (i32, i32) {
    %c0_i32 = arith.constant 0 : i32
    %c0_i32_0 = arith.constant 0 : i32
    return %arg1, %c0_i32 : i32, i32
  }
  func.func @transform_2(%arg0: i32, %arg1: i32) -> (i32, i32) {
    %c0_i32 = arith.constant 0 : i32
    %c0_i32_0 = arith.constant 0 : i32
    return %arg0, %c0_i32 : i32, i32
  }
}

module attributes {stable_mosaic.version = 11 : i64} {
  func.func @_bn_lrelu_kernel(%arg0: i32, %arg1: memref<32x128xf32, #tpu.memory_space<vmem>>, %arg2: memref<1x128xf32, #tpu.memory_space<vmem>>, %arg3: memref<1x128xf32, #tpu.memory_space<vmem>>, %arg4: memref<32x128xf32, #tpu.memory_space<vmem>>) attributes {dimension_semantics = [#tpu.dimension_semantics<parallel>], iteration_bounds = array<i64: 1>, scalar_prefetch = 0 : i64, scratch_operands = 0 : i64, tpu.core_type = #tpu.core_type<tc>, window_params = [{transform_indices = @transform_0, window_bounds = array<i64: 32, 128>}, {pipeline_mode = #tpu.pipeline_mode<synchronous>, transform_indices = @transform_1, window_bounds = array<i64: 1, 128>}, {pipeline_mode = #tpu.pipeline_mode<synchronous>, transform_indices = @transform_2, window_bounds = array<i64: 1, 128>}, {transform_indices = @transform_3, window_bounds = array<i64: 32, 128>}]} {
    %c0 = arith.constant 0 : index
    %c0_0 = arith.constant 0 : index
    %0 = vector.load %arg1[%c0, %c0_0] : memref<32x128xf32, #tpu.memory_space<vmem>>, vector<32x128xf32>
    %c0_1 = arith.constant 0 : index
    %c0_2 = arith.constant 0 : index
    %1 = vector.load %arg2[%c0_1, %c0_2] : memref<1x128xf32, #tpu.memory_space<vmem>>, vector<1x128xf32>
    %2 = vector.broadcast %1 : vector<1x128xf32> to vector<32x128xf32>
    %3 = arith.mulf %0, %2 : vector<32x128xf32>
    %c0_3 = arith.constant 0 : index
    %c0_4 = arith.constant 0 : index
    %4 = vector.load %arg3[%c0_3, %c0_4] : memref<1x128xf32, #tpu.memory_space<vmem>>, vector<1x128xf32>
    %5 = vector.broadcast %4 : vector<1x128xf32> to vector<32x128xf32>
    %6 = arith.addf %3, %5 : vector<32x128xf32>
    %cst = arith.constant 0.000000e+00 : f32
    %7 = vector.broadcast %cst : f32 to vector<32x128xf32>
    %8 = arith.cmpf ogt, %6, %7 : vector<32x128xf32>
    %cst_5 = arith.constant 2.000000e-01 : f32
    %9 = vector.broadcast %cst_5 : f32 to vector<32x128xf32>
    %10 = arith.mulf %9, %6 : vector<32x128xf32>
    %11 = arith.select %8, %6, %10 : vector<32x128xi1>, vector<32x128xf32>
    %c0_6 = arith.constant 0 : index
    %c0_7 = arith.constant 0 : index
    %12 = vector.load %arg4[%c0_6, %c0_7] : memref<32x128xf32, #tpu.memory_space<vmem>>, vector<32x128xf32>
    tpu.vector_store %arg4[%c0_6, %c0_7], %11 {strides = array<i32>} : memref<32x128xf32, #tpu.memory_space<vmem>>, vector<32x128xf32>,
    return
  }
  func.func @transform_0(%arg0: i32) -> (i32, i32) {
    %c0_i32 = arith.constant 0 : i32
    %c0_i32_0 = arith.constant 0 : i32
    return %arg0, %c0_i32 : i32, i32
  }
  func.func @transform_1(%arg0: i32) -> (i32, i32) {
    %c0_i32 = arith.constant 0 : i32
    %c0_i32_0 = arith.constant 0 : i32
    %c0_i32_1 = arith.constant 0 : i32
    return %c0_i32, %c0_i32_0 : i32, i32
  }
  func.func @transform_2(%arg0: i32) -> (i32, i32) {
    %c0_i32 = arith.constant 0 : i32
    %c0_i32_0 = arith.constant 0 : i32
    %c0_i32_1 = arith.constant 0 : i32
    return %c0_i32, %c0_i32_0 : i32, i32
  }
  func.func @transform_3(%arg0: i32) -> (i32, i32) {
    %c0_i32 = arith.constant 0 : i32
    %c0_i32_0 = arith.constant 0 : i32
    return %arg0, %c0_i32 : i32, i32
  }
}

module attributes {stable_mosaic.version = 11 : i64} {
  func.func @_conv_stats_kernel(%arg0: i32, %arg1: i32, %arg2: memref<32x128xbf16, #tpu.memory_space<vmem>>, %arg3: memref<128x128xbf16, #tpu.memory_space<vmem>>, %arg4: memref<32x128xf32, #tpu.memory_space<vmem>>, %arg5: memref<8x128xf32, #tpu.memory_space<vmem>>, %arg6: memref<32x128xf32, #tpu.memory_space<vmem>>) attributes {dimension_semantics = [#tpu.dimension_semantics<parallel>, #tpu.dimension_semantics<arbitrary>], iteration_bounds = array<i64: 1, 1>, scalar_prefetch = 0 : i64, scratch_operands = 1 : i64, tpu.core_type = #tpu.core_type<tc>, window_params = [{transform_indices = @transform_0, window_bounds = array<i64: 32, 128>}, {transform_indices = @transform_1, window_bounds = array<i64: 128, 128>}, {transform_indices = @transform_2, window_bounds = array<i64: 32, 128>}, {transform_indices = @transform_3, window_bounds = array<i64: 8, 128>}]} {
    %c0_i32 = arith.constant 0 : i32
    %0 = arith.cmpi eq, %arg1, %c0_i32 : i32
    %1 = arith.extui %0 : i1 to i32
    %c0_i32_0 = arith.constant 0 : i32
    %2 = arith.cmpi ne, %1, %c0_i32_0 : i32
    scf.if %2 {
      %cst_10 = arith.constant 0.000000e+00 : f32
      %12 = vector.broadcast %cst_10 : f32 to vector<32x128xf32>
      %c0_11 = arith.constant 0 : index
      %c0_12 = arith.constant 0 : index
      %13 = vector.load %arg6[%c0_11, %c0_12] : memref<32x128xf32, #tpu.memory_space<vmem>>, vector<32x128xf32>
      tpu.vector_store %arg6[%c0_11, %c0_12], %12 {strides = array<i32>} : memref<32x128xf32, #tpu.memory_space<vmem>>, vector<32x128xf32>,
    } else {
    }
    %c0 = arith.constant 0 : index
    %c0_1 = arith.constant 0 : index
    %3 = vector.load %arg6[%c0, %c0_1] : memref<32x128xf32, #tpu.memory_space<vmem>>, vector<32x128xf32>
    %c0_2 = arith.constant 0 : index
    %c0_3 = arith.constant 0 : index
    %4 = vector.load %arg2[%c0_2, %c0_3] : memref<32x128xbf16, #tpu.memory_space<vmem>>, vector<32x128xbf16>
    %c0_4 = arith.constant 0 : index
    %c0_5 = arith.constant 0 : index
    %5 = vector.load %arg3[%c0_4, %c0_5] : memref<128x128xbf16, #tpu.memory_space<vmem>>, vector<128x128xbf16>
    %cst = arith.constant dense<0.000000e+00> : vector<32x128xf32>
    %6 = tpu.matmul %4, %5, %cst {dimension_numbers = #tpu.dot_dimension_numbers<[1], [0], [0], [1], [0, 0, 1, 1], [], []>} : vector<32x128xbf16>, vector<128x128xbf16>, vector<32x128xf32> -> vector<32x128xf32>
    %7 = arith.addf %3, %6 : vector<32x128xf32>
    %c0_6 = arith.constant 0 : index
    %c0_7 = arith.constant 0 : index
    %8 = vector.load %arg6[%c0_6, %c0_7] : memref<32x128xf32, #tpu.memory_space<vmem>>, vector<32x128xf32>
    tpu.vector_store %arg6[%c0_6, %c0_7], %7 {strides = array<i32>} : memref<32x128xf32, #tpu.memory_space<vmem>>, vector<32x128xf32>,
    %c0_i32_8 = arith.constant 0 : i32
    %9 = arith.cmpi eq, %arg1, %c0_i32_8 : i32
    %10 = arith.extui %9 : i1 to i32
    %c0_i32_9 = arith.constant 0 : i32
    %11 = arith.cmpi ne, %10, %c0_i32_9 : i32
    scf.if %11 {
      %c0_10 = arith.constant 0 : index
      %c0_11 = arith.constant 0 : index
      %12 = vector.load %arg6[%c0_10, %c0_11] : memref<32x128xf32, #tpu.memory_space<vmem>>, vector<32x128xf32>
      %c0_12 = arith.constant 0 : index
      %c0_13 = arith.constant 0 : index
      %13 = vector.load %arg4[%c0_12, %c0_13] : memref<32x128xf32, #tpu.memory_space<vmem>>, vector<32x128xf32>
      tpu.vector_store %arg4[%c0_12, %c0_13], %12 {strides = array<i32>} : memref<32x128xf32, #tpu.memory_space<vmem>>, vector<32x128xf32>,
      %cst_14 = arith.constant dense<0.000000e+00> : vector<128xf32>
      %14 = vector.multi_reduction <add>, %12, %cst_14 [0] : vector<32x128xf32> to vector<128xf32>
      %15 = vector.shape_cast %14 : vector<128xf32> to vector<1x128xf32>
      %16 = arith.mulf %12, %12 : vector<32x128xf32>
      %cst_15 = arith.constant dense<0.000000e+00> : vector<128xf32>
      %17 = vector.multi_reduction <add>, %16, %cst_15 [0] : vector<32x128xf32> to vector<128xf32>
      %18 = vector.shape_cast %17 : vector<128xf32> to vector<1x128xf32>
      %19 = tpu.iota {dimensions = array<i32: 0>} : vector<8x128xi32>
      %c0_i32_16 = arith.constant 0 : i32
      %20 = vector.broadcast %c0_i32_16 : i32 to vector<8x128xi32>
      %21 = arith.cmpi eq, %19, %20 : vector<8x128xi32>
      %22 = vector.shape_cast %15 : vector<1x128xf32> to vector<1x128xf32>
      %23 = vector.broadcast %22 : vector<1x128xf32> to vector<8x128xf32>
      %c1_i32 = arith.constant 1 : i32
      %24 = vector.broadcast %c1_i32 : i32 to vector<8x128xi32>
      %25 = arith.cmpi eq, %19, %24 : vector<8x128xi32>
      %26 = vector.shape_cast %18 : vector<1x128xf32> to vector<1x128xf32>
      %27 = vector.broadcast %26 : vector<1x128xf32> to vector<8x128xf32>
      %cst_17 = arith.constant 0.000000e+00 : f32
      %28 = vector.broadcast %cst_17 : f32 to vector<8x128xf32>
      %29 = arith.select %25, %27, %28 : vector<8x128xi1>, vector<8x128xf32>
      %30 = arith.select %21, %23, %29 : vector<8x128xi1>, vector<8x128xf32>
      %c0_18 = arith.constant 0 : index
      %c0_19 = arith.constant 0 : index
      %31 = vector.load %arg5[%c0_18, %c0_19] : memref<8x128xf32, #tpu.memory_space<vmem>>, vector<8x128xf32>
      tpu.vector_store %arg5[%c0_18, %c0_19], %30 {strides = array<i32>} : memref<8x128xf32, #tpu.memory_space<vmem>>, vector<8x128xf32>,
    } else {
    }
    return
  }
  func.func @transform_0(%arg0: i32, %arg1: i32) -> (i32, i32) {
    %c0_i32 = arith.constant 0 : i32
    return %arg0, %arg1 : i32, i32
  }
  func.func @transform_1(%arg0: i32, %arg1: i32) -> (i32, i32) {
    %c0_i32 = arith.constant 0 : i32
    %c0_i32_0 = arith.constant 0 : i32
    return %arg1, %c0_i32 : i32, i32
  }
  func.func @transform_2(%arg0: i32, %arg1: i32) -> (i32, i32) {
    %c0_i32 = arith.constant 0 : i32
    %c0_i32_0 = arith.constant 0 : i32
    return %arg0, %c0_i32 : i32, i32
  }
  func.func @transform_3(%arg0: i32, %arg1: i32) -> (i32, i32) {
    %c0_i32 = arith.constant 0 : i32
    %c0_i32_0 = arith.constant 0 : i32
    return %arg0, %c0_i32 : i32, i32
  }
}

module attributes {stable_mosaic.version = 11 : i64} {
  func.func @_conv_stats_kernel(%arg0: i32, %arg1: i32, %arg2: memref<8x256xbf16, #tpu.memory_space<vmem>>, %arg3: memref<256x128xbf16, #tpu.memory_space<vmem>>, %arg4: memref<8x128xf32, #tpu.memory_space<vmem>>, %arg5: memref<8x128xf32, #tpu.memory_space<vmem>>, %arg6: memref<8x128xf32, #tpu.memory_space<vmem>>) attributes {dimension_semantics = [#tpu.dimension_semantics<parallel>, #tpu.dimension_semantics<arbitrary>], iteration_bounds = array<i64: 1, 1>, scalar_prefetch = 0 : i64, scratch_operands = 1 : i64, tpu.core_type = #tpu.core_type<tc>, window_params = [{transform_indices = @transform_0, window_bounds = array<i64: 8, 256>}, {transform_indices = @transform_1, window_bounds = array<i64: 256, 128>}, {transform_indices = @transform_2, window_bounds = array<i64: 8, 128>}, {transform_indices = @transform_3, window_bounds = array<i64: 8, 128>}]} {
    %c0_i32 = arith.constant 0 : i32
    %0 = arith.cmpi eq, %arg1, %c0_i32 : i32
    %1 = arith.extui %0 : i1 to i32
    %c0_i32_0 = arith.constant 0 : i32
    %2 = arith.cmpi ne, %1, %c0_i32_0 : i32
    scf.if %2 {
      %cst_10 = arith.constant 0.000000e+00 : f32
      %12 = vector.broadcast %cst_10 : f32 to vector<8x128xf32>
      %c0_11 = arith.constant 0 : index
      %c0_12 = arith.constant 0 : index
      %13 = vector.load %arg6[%c0_11, %c0_12] : memref<8x128xf32, #tpu.memory_space<vmem>>, vector<8x128xf32>
      tpu.vector_store %arg6[%c0_11, %c0_12], %12 {strides = array<i32>} : memref<8x128xf32, #tpu.memory_space<vmem>>, vector<8x128xf32>,
    } else {
    }
    %c0 = arith.constant 0 : index
    %c0_1 = arith.constant 0 : index
    %3 = vector.load %arg6[%c0, %c0_1] : memref<8x128xf32, #tpu.memory_space<vmem>>, vector<8x128xf32>
    %c0_2 = arith.constant 0 : index
    %c0_3 = arith.constant 0 : index
    %4 = vector.load %arg2[%c0_2, %c0_3] : memref<8x256xbf16, #tpu.memory_space<vmem>>, vector<8x256xbf16>
    %c0_4 = arith.constant 0 : index
    %c0_5 = arith.constant 0 : index
    %5 = vector.load %arg3[%c0_4, %c0_5] : memref<256x128xbf16, #tpu.memory_space<vmem>>, vector<256x128xbf16>
    %cst = arith.constant dense<0.000000e+00> : vector<8x128xf32>
    %6 = tpu.matmul %4, %5, %cst {dimension_numbers = #tpu.dot_dimension_numbers<[1], [0], [0], [1], [0, 0, 1, 1], [], []>} : vector<8x256xbf16>, vector<256x128xbf16>, vector<8x128xf32> -> vector<8x128xf32>
    %7 = arith.addf %3, %6 : vector<8x128xf32>
    %c0_6 = arith.constant 0 : index
    %c0_7 = arith.constant 0 : index
    %8 = vector.load %arg6[%c0_6, %c0_7] : memref<8x128xf32, #tpu.memory_space<vmem>>, vector<8x128xf32>
    tpu.vector_store %arg6[%c0_6, %c0_7], %7 {strides = array<i32>} : memref<8x128xf32, #tpu.memory_space<vmem>>, vector<8x128xf32>,
    %c0_i32_8 = arith.constant 0 : i32
    %9 = arith.cmpi eq, %arg1, %c0_i32_8 : i32
    %10 = arith.extui %9 : i1 to i32
    %c0_i32_9 = arith.constant 0 : i32
    %11 = arith.cmpi ne, %10, %c0_i32_9 : i32
    scf.if %11 {
      %c0_10 = arith.constant 0 : index
      %c0_11 = arith.constant 0 : index
      %12 = vector.load %arg6[%c0_10, %c0_11] : memref<8x128xf32, #tpu.memory_space<vmem>>, vector<8x128xf32>
      %c0_12 = arith.constant 0 : index
      %c0_13 = arith.constant 0 : index
      %13 = vector.load %arg4[%c0_12, %c0_13] : memref<8x128xf32, #tpu.memory_space<vmem>>, vector<8x128xf32>
      tpu.vector_store %arg4[%c0_12, %c0_13], %12 {strides = array<i32>} : memref<8x128xf32, #tpu.memory_space<vmem>>, vector<8x128xf32>,
      %cst_14 = arith.constant dense<0.000000e+00> : vector<128xf32>
      %14 = vector.multi_reduction <add>, %12, %cst_14 [0] : vector<8x128xf32> to vector<128xf32>
      %15 = vector.shape_cast %14 : vector<128xf32> to vector<1x128xf32>
      %16 = arith.mulf %12, %12 : vector<8x128xf32>
      %cst_15 = arith.constant dense<0.000000e+00> : vector<128xf32>
      %17 = vector.multi_reduction <add>, %16, %cst_15 [0] : vector<8x128xf32> to vector<128xf32>
      %18 = vector.shape_cast %17 : vector<128xf32> to vector<1x128xf32>
      %19 = tpu.iota {dimensions = array<i32: 0>} : vector<8x128xi32>
      %c0_i32_16 = arith.constant 0 : i32
      %20 = vector.broadcast %c0_i32_16 : i32 to vector<8x128xi32>
      %21 = arith.cmpi eq, %19, %20 : vector<8x128xi32>
      %22 = vector.shape_cast %15 : vector<1x128xf32> to vector<1x128xf32>
      %23 = vector.broadcast %22 : vector<1x128xf32> to vector<8x128xf32>
      %c1_i32 = arith.constant 1 : i32
      %24 = vector.broadcast %c1_i32 : i32 to vector<8x128xi32>
      %25 = arith.cmpi eq, %19, %24 : vector<8x128xi32>
      %26 = vector.shape_cast %18 : vector<1x128xf32> to vector<1x128xf32>
      %27 = vector.broadcast %26 : vector<1x128xf32> to vector<8x128xf32>
      %cst_17 = arith.constant 0.000000e+00 : f32
      %28 = vector.broadcast %cst_17 : f32 to vector<8x128xf32>
      %29 = arith.select %25, %27, %28 : vector<8x128xi1>, vector<8x128xf32>
      %30 = arith.select %21, %23, %29 : vector<8x128xi1>, vector<8x128xf32>
      %c0_18 = arith.constant 0 : index
      %c0_19 = arith.constant 0 : index
      %31 = vector.load %arg5[%c0_18, %c0_19] : memref<8x128xf32, #tpu.memory_space<vmem>>, vector<8x128xf32>
      tpu.vector_store %arg5[%c0_18, %c0_19], %30 {strides = array<i32>} : memref<8x128xf32, #tpu.memory_space<vmem>>, vector<8x128xf32>,
    } else {
    }
    return
  }
  func.func @transform_0(%arg0: i32, %arg1: i32) -> (i32, i32) {
    %c0_i32 = arith.constant 0 : i32
    return %arg0, %arg1 : i32, i32
  }
  func.func @transform_1(%arg0: i32, %arg1: i32) -> (i32, i32) {
    %c0_i32 = arith.constant 0 : i32
    %c0_i32_0 = arith.constant 0 : i32
    return %arg1, %c0_i32 : i32, i32
  }
  func.func @transform_2(%arg0: i32, %arg1: i32) -> (i32, i32) {
    %c0_i32 = arith.constant 0 : i32
    %c0_i32_0 = arith.constant 0 : i32
    return %arg0, %c0_i32 : i32, i32
  }
  func.func @transform_3(%arg0: i32, %arg1: i32) -> (i32, i32) {
    %c0_i32 = arith.constant 0 : i32
    %c0_i32_0 = arith.constant 0 : i32
    return %arg0, %c0_i32 : i32, i32
  }
}

module attributes {stable_mosaic.version = 11 : i64} {
  func.func @_bn_lrelu_kernel(%arg0: i32, %arg1: memref<8x128xf32, #tpu.memory_space<vmem>>, %arg2: memref<1x128xf32, #tpu.memory_space<vmem>>, %arg3: memref<1x128xf32, #tpu.memory_space<vmem>>, %arg4: memref<8x128xf32, #tpu.memory_space<vmem>>) attributes {dimension_semantics = [#tpu.dimension_semantics<parallel>], iteration_bounds = array<i64: 1>, scalar_prefetch = 0 : i64, scratch_operands = 0 : i64, tpu.core_type = #tpu.core_type<tc>, window_params = [{transform_indices = @transform_0, window_bounds = array<i64: 8, 128>}, {pipeline_mode = #tpu.pipeline_mode<synchronous>, transform_indices = @transform_1, window_bounds = array<i64: 1, 128>}, {pipeline_mode = #tpu.pipeline_mode<synchronous>, transform_indices = @transform_2, window_bounds = array<i64: 1, 128>}, {transform_indices = @transform_3, window_bounds = array<i64: 8, 128>}]} {
    %c0 = arith.constant 0 : index
    %c0_0 = arith.constant 0 : index
    %0 = vector.load %arg1[%c0, %c0_0] : memref<8x128xf32, #tpu.memory_space<vmem>>, vector<8x128xf32>
    %c0_1 = arith.constant 0 : index
    %c0_2 = arith.constant 0 : index
    %1 = vector.load %arg2[%c0_1, %c0_2] : memref<1x128xf32, #tpu.memory_space<vmem>>, vector<1x128xf32>
    %2 = vector.broadcast %1 : vector<1x128xf32> to vector<8x128xf32>
    %3 = arith.mulf %0, %2 : vector<8x128xf32>
    %c0_3 = arith.constant 0 : index
    %c0_4 = arith.constant 0 : index
    %4 = vector.load %arg3[%c0_3, %c0_4] : memref<1x128xf32, #tpu.memory_space<vmem>>, vector<1x128xf32>
    %5 = vector.broadcast %4 : vector<1x128xf32> to vector<8x128xf32>
    %6 = arith.addf %3, %5 : vector<8x128xf32>
    %cst = arith.constant 0.000000e+00 : f32
    %7 = vector.broadcast %cst : f32 to vector<8x128xf32>
    %8 = arith.cmpf ogt, %6, %7 : vector<8x128xf32>
    %cst_5 = arith.constant 2.000000e-01 : f32
    %9 = vector.broadcast %cst_5 : f32 to vector<8x128xf32>
    %10 = arith.mulf %9, %6 : vector<8x128xf32>
    %11 = arith.select %8, %6, %10 : vector<8x128xi1>, vector<8x128xf32>
    %c0_6 = arith.constant 0 : index
    %c0_7 = arith.constant 0 : index
    %12 = vector.load %arg4[%c0_6, %c0_7] : memref<8x128xf32, #tpu.memory_space<vmem>>, vector<8x128xf32>
    tpu.vector_store %arg4[%c0_6, %c0_7], %11 {strides = array<i32>} : memref<8x128xf32, #tpu.memory_space<vmem>>, vector<8x128xf32>,
    return
  }
  func.func @transform_0(%arg0: i32) -> (i32, i32) {
    %c0_i32 = arith.constant 0 : i32
    %c0_i32_0 = arith.constant 0 : i32
    return %arg0, %c0_i32 : i32, i32
  }
  func.func @transform_1(%arg0: i32) -> (i32, i32) {
    %c0_i32 = arith.constant 0 : i32
    %c0_i32_0 = arith.constant 0 : i32
    %c0_i32_1 = arith.constant 0 : i32
    return %c0_i32, %c0_i32_0 : i32, i32
  }
  func.func @transform_2(%arg0: i32) -> (i32, i32) {
    %c0_i32 = arith.constant 0 : i32
    %c0_i32_0 = arith.constant 0 : i32
    %c0_i32_1 = arith.constant 0 : i32
    return %c0_i32, %c0_i32_0 : i32, i32
  }
  func.func @transform_3(%arg0: i32) -> (i32, i32) {
    %c0_i32 = arith.constant 0 : i32
    %c0_i32_0 = arith.constant 0 : i32
    return %arg0, %c0_i32 : i32, i32
  }
}

module attributes {stable_mosaic.version = 11 : i64} {
  func.func @_conv_stats_kernel(%arg0: i32, %arg1: i32, %arg2: memref<8x512xbf16, #tpu.memory_space<vmem>>, %arg3: memref<512x128xbf16, #tpu.memory_space<vmem>>, %arg4: memref<8x128xf32, #tpu.memory_space<vmem>>, %arg5: memref<8x128xf32, #tpu.memory_space<vmem>>, %arg6: memref<8x128xf32, #tpu.memory_space<vmem>>) attributes {dimension_semantics = [#tpu.dimension_semantics<parallel>, #tpu.dimension_semantics<arbitrary>], iteration_bounds = array<i64: 1, 1>, scalar_prefetch = 0 : i64, scratch_operands = 1 : i64, tpu.core_type = #tpu.core_type<tc>, window_params = [{transform_indices = @transform_0, window_bounds = array<i64: 8, 512>}, {transform_indices = @transform_1, window_bounds = array<i64: 512, 128>}, {transform_indices = @transform_2, window_bounds = array<i64: 8, 128>}, {transform_indices = @transform_3, window_bounds = array<i64: 8, 128>}]} {
    %c0_i32 = arith.constant 0 : i32
    %0 = arith.cmpi eq, %arg1, %c0_i32 : i32
    %1 = arith.extui %0 : i1 to i32
    %c0_i32_0 = arith.constant 0 : i32
    %2 = arith.cmpi ne, %1, %c0_i32_0 : i32
    scf.if %2 {
      %cst_10 = arith.constant 0.000000e+00 : f32
      %12 = vector.broadcast %cst_10 : f32 to vector<8x128xf32>
      %c0_11 = arith.constant 0 : index
      %c0_12 = arith.constant 0 : index
      %13 = vector.load %arg6[%c0_11, %c0_12] : memref<8x128xf32, #tpu.memory_space<vmem>>, vector<8x128xf32>
      tpu.vector_store %arg6[%c0_11, %c0_12], %12 {strides = array<i32>} : memref<8x128xf32, #tpu.memory_space<vmem>>, vector<8x128xf32>,
    } else {
    }
    %c0 = arith.constant 0 : index
    %c0_1 = arith.constant 0 : index
    %3 = vector.load %arg6[%c0, %c0_1] : memref<8x128xf32, #tpu.memory_space<vmem>>, vector<8x128xf32>
    %c0_2 = arith.constant 0 : index
    %c0_3 = arith.constant 0 : index
    %4 = vector.load %arg2[%c0_2, %c0_3] : memref<8x512xbf16, #tpu.memory_space<vmem>>, vector<8x512xbf16>
    %c0_4 = arith.constant 0 : index
    %c0_5 = arith.constant 0 : index
    %5 = vector.load %arg3[%c0_4, %c0_5] : memref<512x128xbf16, #tpu.memory_space<vmem>>, vector<512x128xbf16>
    %cst = arith.constant dense<0.000000e+00> : vector<8x128xf32>
    %6 = tpu.matmul %4, %5, %cst {dimension_numbers = #tpu.dot_dimension_numbers<[1], [0], [0], [1], [0, 0, 1, 1], [], []>} : vector<8x512xbf16>, vector<512x128xbf16>, vector<8x128xf32> -> vector<8x128xf32>
    %7 = arith.addf %3, %6 : vector<8x128xf32>
    %c0_6 = arith.constant 0 : index
    %c0_7 = arith.constant 0 : index
    %8 = vector.load %arg6[%c0_6, %c0_7] : memref<8x128xf32, #tpu.memory_space<vmem>>, vector<8x128xf32>
    tpu.vector_store %arg6[%c0_6, %c0_7], %7 {strides = array<i32>} : memref<8x128xf32, #tpu.memory_space<vmem>>, vector<8x128xf32>,
    %c0_i32_8 = arith.constant 0 : i32
    %9 = arith.cmpi eq, %arg1, %c0_i32_8 : i32
    %10 = arith.extui %9 : i1 to i32
    %c0_i32_9 = arith.constant 0 : i32
    %11 = arith.cmpi ne, %10, %c0_i32_9 : i32
    scf.if %11 {
      %c0_10 = arith.constant 0 : index
      %c0_11 = arith.constant 0 : index
      %12 = vector.load %arg6[%c0_10, %c0_11] : memref<8x128xf32, #tpu.memory_space<vmem>>, vector<8x128xf32>
      %c0_12 = arith.constant 0 : index
      %c0_13 = arith.constant 0 : index
      %13 = vector.load %arg4[%c0_12, %c0_13] : memref<8x128xf32, #tpu.memory_space<vmem>>, vector<8x128xf32>
      tpu.vector_store %arg4[%c0_12, %c0_13], %12 {strides = array<i32>} : memref<8x128xf32, #tpu.memory_space<vmem>>, vector<8x128xf32>,
      %cst_14 = arith.constant dense<0.000000e+00> : vector<128xf32>
      %14 = vector.multi_reduction <add>, %12, %cst_14 [0] : vector<8x128xf32> to vector<128xf32>
      %15 = vector.shape_cast %14 : vector<128xf32> to vector<1x128xf32>
      %16 = arith.mulf %12, %12 : vector<8x128xf32>
      %cst_15 = arith.constant dense<0.000000e+00> : vector<128xf32>
      %17 = vector.multi_reduction <add>, %16, %cst_15 [0] : vector<8x128xf32> to vector<128xf32>
      %18 = vector.shape_cast %17 : vector<128xf32> to vector<1x128xf32>
      %19 = tpu.iota {dimensions = array<i32: 0>} : vector<8x128xi32>
      %c0_i32_16 = arith.constant 0 : i32
      %20 = vector.broadcast %c0_i32_16 : i32 to vector<8x128xi32>
      %21 = arith.cmpi eq, %19, %20 : vector<8x128xi32>
      %22 = vector.shape_cast %15 : vector<1x128xf32> to vector<1x128xf32>
      %23 = vector.broadcast %22 : vector<1x128xf32> to vector<8x128xf32>
      %c1_i32 = arith.constant 1 : i32
      %24 = vector.broadcast %c1_i32 : i32 to vector<8x128xi32>
      %25 = arith.cmpi eq, %19, %24 : vector<8x128xi32>
      %26 = vector.shape_cast %18 : vector<1x128xf32> to vector<1x128xf32>
      %27 = vector.broadcast %26 : vector<1x128xf32> to vector<8x128xf32>
      %cst_17 = arith.constant 0.000000e+00 : f32
      %28 = vector.broadcast %cst_17 : f32 to vector<8x128xf32>
      %29 = arith.select %25, %27, %28 : vector<8x128xi1>, vector<8x128xf32>
      %30 = arith.select %21, %23, %29 : vector<8x128xi1>, vector<8x128xf32>
      %c0_18 = arith.constant 0 : index
      %c0_19 = arith.constant 0 : index
      %31 = vector.load %arg5[%c0_18, %c0_19] : memref<8x128xf32, #tpu.memory_space<vmem>>, vector<8x128xf32>
      tpu.vector_store %arg5[%c0_18, %c0_19], %30 {strides = array<i32>} : memref<8x128xf32, #tpu.memory_space<vmem>>, vector<8x128xf32>,
    } else {
    }
    return
  }
  func.func @transform_0(%arg0: i32, %arg1: i32) -> (i32, i32) {
    %c0_i32 = arith.constant 0 : i32
    return %arg0, %arg1 : i32, i32
  }
  func.func @transform_1(%arg0: i32, %arg1: i32) -> (i32, i32) {
    %c0_i32 = arith.constant 0 : i32
    %c0_i32_0 = arith.constant 0 : i32
    return %arg1, %c0_i32 : i32, i32
  }
  func.func @transform_2(%arg0: i32, %arg1: i32) -> (i32, i32) {
    %c0_i32 = arith.constant 0 : i32
    %c0_i32_0 = arith.constant 0 : i32
    return %arg0, %c0_i32 : i32, i32
  }
  func.func @transform_3(%arg0: i32, %arg1: i32) -> (i32, i32) {
    %c0_i32 = arith.constant 0 : i32
    %c0_i32_0 = arith.constant 0 : i32
    return %arg0, %c0_i32 : i32, i32
  }
}

</mosaic_0001>

<llo_original>
// kernel: d_net64_forward.7
$region0: #{d_net64_forward.7}
  #allocation0 [shape = 'u32[]', space=smem, size = 0x4, offset = 0x4, fixed_abs, tag = 'smem constant byte address 0x4 - core index']
  #allocation1 [shape = 'u32[72,128]{1,0:T(1,128)}', space=vmem, size = 0x9000, scoped, tag = 'internal scratch']
  #allocation2 [shape = 'f32[128,128]{1,0:T(8,128)}', space=vmem, size = 0x10000, scoped, tag = 'scratch operand']
  %s0 = inlined_call_operand.vmem [shape: bf16[128,128], index: 0, kind: input, shape index: {}]
  %s1 = inlined_call_operand.vmem [shape: bf16[128,128], index: 1, kind: input, shape index: {}]
  %s2 = inlined_call_operand.vmem [shape: f32[128,128], index: 2, kind: output, shape index: {}]
  %s3 = sld [smem:[#allocation0]]
  $region26: #{d_net64_forward.7} parent=0
    _
  %s5 = ssub.s32 1, %s3
  %s6 = scalar_select 0, %s5, %s3
  // Predicated region
  $region2: #{d_net64_forward.7} parent=0 // pred_check
    _
  $region3: #{d_net64_forward.7} parent=0 // pred_check_branch
    %8 = sbr.rel (0) target = $region5
  $region4: #{d_net64_forward.7} parent=0 // pred_region
    _
  $region5: #{d_net64_forward.7} parent=0 // pred_fallthru
    _
  // Predicated region
  $region6: #{d_net64_forward.7} parent=0 // pred_check
    _
  $region7: #{d_net64_forward.7} parent=0 // pred_check_branch
    %10 = sbr.rel (0) target = $region9
  $region8: #{d_net64_forward.7} parent=0 // pred_region
    _
  $region9: #{d_net64_forward.7} parent=0 // pred_fallthru
    _
  %p11 = scmp.eq.s32.totalorder 0, 0
  // Predicated region
  $region10: #{d_net64_forward.7} parent=0 // pred_check
    %p12 = pneg %p11
  $region11: #{d_net64_forward.7} parent=0 // pred_check_branch
    %14 = sbr.rel (%p12) target = $region13
  $region12: #{d_net64_forward.7} parent=0 // pred_region
    %15 = vst [vmem:[#allocation2] sm:$0xff] 0.0
    %16 = vst [vmem:[#allocation2 + $0x8] sm:$0xff] 0.0
    %17 = vst [vmem:[#allocation2 + $0x10] sm:$0xff] 0.0
    %18 = vst [vmem:[#allocation2 + $0x18] sm:$0xff] 0.0
    %19 = vst [vmem:[#allocation2 + $0x20] sm:$0xff] 0.0
    %20 = vst [vmem:[#allocation2 + $0x28] sm:$0xff] 0.0
    %21 = vst [vmem:[#allocation2 + $0x30] sm:$0xff] 0.0
    %22 = vst [vmem:[#allocation2 + $0x38] sm:$0xff] 0.0
    %23 = vst [vmem:[#allocation2 + $0x40] sm:$0xff] 0.0
    %24 = vst [vmem:[#allocation2 + $0x48] sm:$0xff] 0.0
    %25 = vst [vmem:[#allocation2 + $0x50] sm:$0xff] 0.0
    %26 = vst [vmem:[#allocation2 + $0x58] sm:$0xff] 0.0
    %27 = vst [vmem:[#allocation2 + $0x60] sm:$0xff] 0.0
    %28 = vst [vmem:[#allocation2 + $0x68] sm:$0xff] 0.0
    %29 = vst [vmem:[#allocation2 + $0x70] sm:$0xff] 0.0
    %30 = vst [vmem:[#allocation2 + $0x78] sm:$0xff] 0.0
  $region13: #{d_net64_forward.7} parent=0 // pred_fallthru
    _
  %v31 = vld [vmem:[#allocation2] sm:$0xff]
  %v32 = vld [vmem:[#allocation2 + $0x8] sm:$0xff]
  %v33 = vld [vmem:[#allocation2 + $0x10] sm:$0xff]
  %v34 = vld [vmem:[#allocation2 + $0x18] sm:$0xff]
  %v35 = vld [vmem:[#allocation2 + $0x20] sm:$0xff]
  %v36 = vld [vmem:[#allocation2 + $0x28] sm:$0xff]
  %v37 = vld [vmem:[#allocation2 + $0x30] sm:$0xff]
  %v38 = vld [vmem:[#allocation2 + $0x38] sm:$0xff]
  %v39 = vld [vmem:[#allocation2 + $0x40] sm:$0xff]
  %v40 = vld [vmem:[#allocation2 + $0x48] sm:$0xff]
  %v41 = vld [vmem:[#allocation2 + $0x50] sm:$0xff]
  %v42 = vld [vmem:[#allocation2 + $0x58] sm:$0xff]
  %v43 = vld [vmem:[#allocation2 + $0x60] sm:$0xff]
  %v44 = vld [vmem:[#allocation2 + $0x68] sm:$0xff]
  %v45 = vld [vmem:[#allocation2 + $0x70] sm:$0xff]
  %v46 = vld [vmem:[#allocation2 + $0x78] sm:$0xff]
  %v47 = vld [vmem:[%s0] sm:$0xf]
  %v48 = vld [vmem:[%s0 + $0x4] sm:$0xf]
  %v49 = vld [vmem:[%s0 + $0x8] sm:$0xf]
  %v50 = vld [vmem:[%s0 + $0xc] sm:$0xf]
  %v51 = vld [vmem:[%s0 + $0x10] sm:$0xf]
  %v52 = vld [vmem:[%s0 + $0x14] sm:$0xf]
  %v53 = vld [vmem:[%s0 + $0x18] sm:$0xf]
  %v54 = vld [vmem:[%s0 + $0x1c] sm:$0xf]
  %v55 = vld [vmem:[%s0 + $0x20] sm:$0xf]
  %v56 = vld [vmem:[%s0 + $0x24] sm:$0xf]
  %v57 = vld [vmem:[%s0 + $0x28] sm:$0xf]
  %v58 = vld [vmem:[%s0 + $0x2c] sm:$0xf]
  %v59 = vld [vmem:[%s0 + $0x30] sm:$0xf]
  %v60 = vld [vmem:[%s0 + $0x34] sm:$0xf]
  %v61 = vld [vmem:[%s0 + $0x38] sm:$0xf]
  %v62 = vld [vmem:[%s0 + $0x3c] sm:$0xf]
  %v63 = vld [vmem:[%s1] sm:$0xf]
  %v64 = vld [vmem:[%s1 + $0x4] sm:$0xf]
  %v65 = vld [vmem:[%s1 + $0x8] sm:$0xf]
  %v66 = vld [vmem:[%s1 + $0xc] sm:$0xf]
  %v67 = vld [vmem:[%s1 + $0x10] sm:$0xf]
  %v68 = vld [vmem:[%s1 + $0x14] sm:$0xf]
  %v69 = vld [vmem:[%s1 + $0x18] sm:$0xf]
  %v70 = vld [vmem:[%s1 + $0x1c] sm:$0xf]
  %v71 = vld [vmem:[%s1 + $0x20] sm:$0xf]
  %v72 = vld [vmem:[%s1 + $0x24] sm:$0xf]
  %v73 = vld [vmem:[%s1 + $0x28] sm:$0xf]
  %v74 = vld [vmem:[%s1 + $0x2c] sm:$0xf]
  %v75 = vld [vmem:[%s1 + $0x30] sm:$0xf]
  %v76 = vld [vmem:[%s1 + $0x34] sm:$0xf]
  %v77 = vld [vmem:[%s1 + $0x38] sm:$0xf]
  %v78 = vld [vmem:[%s1 + $0x3c] sm:$0xf]
  %v95 = vunpack.c.l.b16 %v47
  %v96 = vunpack.c.l.b16 %v48
  %v97 = vunpack.c.l.b16 %v49
  %v98 = vunpack.c.l.b16 %v50
  %v99 = vunpack.c.l.b16 %v51
  %v100 = vunpack.c.l.b16 %v52
  %v101 = vunpack.c.l.b16 %v53
  %v102 = vunpack.c.l.b16 %v54
  %v103 = vunpack.c.l.b16 %v55
  %v104 = vunpack.c.l.b16 %v56
  %v105 = vunpack.c.l.b16 %v57
  %v106 = vunpack.c.l.b16 %v58
  %v107 = vunpack.c.l.b16 %v59
  %v108 = vunpack.c.l.b16 %v60
  %v109 = vunpack.c.l.b16 %v61
  %v110 = vunpack.c.l.b16 %v62
  %v111 = vpack.c.b16 %v96, %v95
  %v112 = vpack.c.b16 %v98, %v97
  %v113 = vpack.c.b16 %v100, %v99
  %v114 = vpack.c.b16 %v102, %v101
  %v115 = vpack.c.b16 %v104, %v103
  %v116 = vpack.c.b16 %v106, %v105
  %v117 = vpack.c.b16 %v108, %v107
  %v118 = vpack.c.b16 %v110, %v109
  %v143 = vunpack.c.l.b16 %v63
  %v144 = vunpack.c.l.b16 %v64
  %v145 = vunpack.c.l.b16 %v65
  %v146 = vunpack.c.l.b16 %v66
  %v147 = vunpack.c.l.b16 %v67
  %v148 = vunpack.c.l.b16 %v68
  %v149 = vunpack.c.l.b16 %v69
  %v150 = vunpack.c.l.b16 %v70
  %v151 = vunpack.c.l.b16 %v71
  %v152 = vunpack.c.l.b16 %v72
  %v153 = vunpack.c.l.b16 %v73
  %v154 = vunpack.c.l.b16 %v74
  %v155 = vunpack.c.l.b16 %v75
  %v156 = vunpack.c.l.b16 %v76
  %v157 = vunpack.c.l.b16 %v77
  %v158 = vunpack.c.l.b16 %v78
  %v159 = vpack.c.b16 %v144, %v143
  %v160 = vpack.c.b16 %v146, %v145
  %v161 = vpack.c.b16 %v148, %v147
  %v162 = vpack.c.b16 %v150, %v149
  %v163 = vpack.c.b16 %v152, %v151
  %v164 = vpack.c.b16 %v154, %v153
  %v165 = vpack.c.b16 %v156, %v155
  %v166 = vpack.c.b16 %v158, %v157
  %175 = vmatpush.bf16.msra.mxu0 %v166
  %176 = vmatpush.bf16.msra.mxu0 %v165
  %177 = vmatpush.bf16.msra.mxu0 %v164
  %178 = vmatpush.bf16.msra.mxu0 %v163
  %179 = vmatpush.bf16.msra.mxu0 %v162
  %180 = vmatpush.bf16.msra.mxu0 %v161
  %181 = vmatpush.bf16.msra.mxu0 %v160
  %182 = vmatpush.bf16.msra.mxu0 %v159
  %183 = vmatmul.bf16.gmra.mxu0 %v111
  %v184 = vpop.f32.mrf.mxu0
  %v185 = vadd.f32 0.0, %v184
  %v186 = vpop.f32.mrf.mxu0
  %v187 = vadd.f32 0.0, %v186
  %188 = vmatmul.bf16.gmra.mxu0 %v112
  %v189 = vpop.f32.mrf.mxu0
  %v190 = vadd.f32 0.0, %v189
  %v191 = vpop.f32.mrf.mxu0
  %v192 = vadd.f32 0.0, %v191
  %193 = vmatmul.bf16.gmra.mxu0 %v113
  %v194 = vpop.f32.mrf.mxu0
  %v195 = vadd.f32 0.0, %v194
  %v196 = vpop.f32.mrf.mxu0
  %v197 = vadd.f32 0.0, %v196
  %198 = vmatmul.bf16.gmra.mxu0 %v114
  %v199 = vpop.f32.mrf.mxu0
  %v200 = vadd.f32 0.0, %v199
  %v201 = vpop.f32.mrf.mxu0
  %v202 = vadd.f32 0.0, %v201
  %203 = vmatmul.bf16.gmra.mxu0 %v115
  %v204 = vpop.f32.mrf.mxu0
  %v205 = vadd.f32 0.0, %v204
  %v206 = vpop.f32.mrf.mxu0
  %v207 = vadd.f32 0.0, %v206
  %208 = vmatmul.bf16.gmra.mxu0 %v116
  %v209 = vpop.f32.mrf.mxu0
  %v210 = vadd.f32 0.0, %v209
  %v211 = vpop.f32.mrf.mxu0
  %v212 = vadd.f32 0.0, %v211
  %213 = vmatmul.bf16.gmra.mxu0 %v117
  %v214 = vpop.f32.mrf.mxu0
  %v215 = vadd.f32 0.0, %v214
  %v216 = vpop.f32.mrf.mxu0
  %v217 = vadd.f32 0.0, %v216
  %218 = vmatmul.bf16.gmra.mxu0 %v118
  %v219 = vpop.f32.mrf.mxu0
  %v220 = vadd.f32 0.0, %v219
  %v221 = vpop.f32.mrf.mxu0
  %v222 = vadd.f32 0.0, %v221
  %223 = vdwg.mxu0
  %v224 = vadd.f32 %v31, %v185
  %v225 = vadd.f32 %v32, %v187
  %v226 = vadd.f32 %v33, %v190
  %v227 = vadd.f32 %v34, %v192
  %v228 = vadd.f32 %v35, %v195
  %v229 = vadd.f32 %v36, %v197
  %v230 = vadd.f32 %v37, %v200
  %v231 = vadd.f32 %v38, %v202
  %v232 = vadd.f32 %v39, %v205
  %v233 = vadd.f32 %v40, %v207
  %v234 = vadd.f32 %v41, %v210
  %v235 = vadd.f32 %v42, %v212
  %v236 = vadd.f32 %v43, %v215
  %v237 = vadd.f32 %v44, %v217
  %v238 = vadd.f32 %v45, %v220
  %v239 = vadd.f32 %v46, %v222
  %240 = vst [vmem:[#allocation2] sm:$0xff] %v224
  %241 = vst [vmem:[#allocation2 + $0x8] sm:$0xff] %v225
  %242 = vst [vmem:[#allocation2 + $0x10] sm:$0xff] %v226
  %243 = vst [vmem:[#allocation2 + $0x18] sm:$0xff] %v227
  %244 = vst [vmem:[#allocation2 + $0x20] sm:$0xff] %v228
  %245 = vst [vmem:[#allocation2 + $0x28] sm:$0xff] %v229
  %246 = vst [vmem:[#allocation2 + $0x30] sm:$0xff] %v230
  %247 = vst [vmem:[#allocation2 + $0x38] sm:$0xff] %v231
  %248 = vst [vmem:[#allocation2 + $0x40] sm:$0xff] %v232
  %249 = vst [vmem:[#allocation2 + $0x48] sm:$0xff] %v233
  %250 = vst [vmem:[#allocation2 + $0x50] sm:$0xff] %v234
  %251 = vst [vmem:[#allocation2 + $0x58] sm:$0xff] %v235
  %252 = vst [vmem:[#allocation2 + $0x60] sm:$0xff] %v236
  %253 = vst [vmem:[#allocation2 + $0x68] sm:$0xff] %v237
  %254 = vst [vmem:[#allocation2 + $0x70] sm:$0xff] %v238
  %255 = vst [vmem:[#allocation2 + $0x78] sm:$0xff] %v239
  // Predicated region
  $region14: #{d_net64_forward.7} parent=0 // pred_check
    %p256 = pneg %p11
  $region15: #{d_net64_forward.7} parent=0 // pred_check_branch
    %258 = sbr.rel (%p256) target = $region17
  $region16: #{d_net64_forward.7} parent=0 // pred_region
    %v259 = vld [vmem:[#allocation2] sm:$0xff]
    %v260 = vld [vmem:[#allocation2 + $0x8] sm:$0xff]
    %v261 = vld [vmem:[#allocation2 + $0x10] sm:$0xff]
    %v262 = vld [vmem:[#allocation2 + $0x18] sm:$0xff]
    %v263 = vld [vmem:[#allocation2 + $0x20] sm:$0xff]
    %v264 = vld [vmem:[#allocation2 + $0x28] sm:$0xff]
    %v265 = vld [vmem:[#allocation2 + $0x30] sm:$0xff]
    %v266 = vld [vmem:[#allocation2 + $0x38] sm:$0xff]
    %v267 = vld [vmem:[#allocation2 + $0x40] sm:$0xff]
    %v268 = vld [vmem:[#allocation2 + $0x48] sm:$0xff]
    %v269 = vld [vmem:[#allocation2 + $0x50] sm:$0xff]
    %v270 = vld [vmem:[#allocation2 + $0x58] sm:$0xff]
    %v271 = vld [vmem:[#allocation2 + $0x60] sm:$0xff]
    %v272 = vld [vmem:[#allocation2 + $0x68] sm:$0xff]
    %v273 = vld [vmem:[#allocation2 + $0x70] sm:$0xff]
    %v274 = vld [vmem:[#allocation2 + $0x78] sm:$0xff]
    %vm275 = vcmp.gt.f32.partialorder %v259, 0.0
    %vm276 = vcmp.gt.f32.partialorder %v260, 0.0
    %vm277 = vcmp.gt.f32.partialorder %v261, 0.0
    %vm278 = vcmp.gt.f32.partialorder %v262, 0.0
    %vm279 = vcmp.gt.f32.partialorder %v263, 0.0
    %vm280 = vcmp.gt.f32.partialorder %v264, 0.0
    %vm281 = vcmp.gt.f32.partialorder %v265, 0.0
    %vm282 = vcmp.gt.f32.partialorder %v266, 0.0
    %vm283 = vcmp.gt.f32.partialorder %v267, 0.0
    %vm284 = vcmp.gt.f32.partialorder %v268, 0.0
    %vm285 = vcmp.gt.f32.partialorder %v269, 0.0
    %vm286 = vcmp.gt.f32.partialorder %v270, 0.0
    %vm287 = vcmp.gt.f32.partialorder %v271, 0.0
    %vm288 = vcmp.gt.f32.partialorder %v272, 0.0
    %vm289 = vcmp.gt.f32.partialorder %v273, 0.0
    %vm290 = vcmp.gt.f32.partialorder %v274, 0.0
    %v291 = vmul.f32 %v259, 0.2
    %v292 = vmul.f32 %v260, 0.2
    %v293 = vmul.f32 %v261, 0.2
    %v294 = vmul.f32 %v262, 0.2
    %v295 = vmul.f32 %v263, 0.2
    %v296 = vmul.f32 %v264, 0.2
    %v297 = vmul.f32 %v265, 0.2
    %v298 = vmul.f32 %v266, 0.2
    %v299 = vmul.f32 %v267, 0.2
    %v300 = vmul.f32 %v268, 0.2
    %v301 = vmul.f32 %v269, 0.2
    %v302 = vmul.f32 %v270, 0.2
    %v303 = vmul.f32 %v271, 0.2
    %v304 = vmul.f32 %v272, 0.2
    %v305 = vmul.f32 %v273, 0.2
    %v306 = vmul.f32 %v274, 0.2
    %v307 = vsel %vm275, %v259, %v291
    %v308 = vsel %vm276, %v260, %v292
    %v309 = vsel %vm277, %v261, %v293
    %v310 = vsel %vm278, %v262, %v294
    %v311 = vsel %vm279, %v263, %v295
    %v312 = vsel %vm280, %v264, %v296
    %v313 = vsel %vm281, %v265, %v297
    %v314 = vsel %vm282, %v266, %v298
    %v315 = vsel %vm283, %v267, %v299
    %v316 = vsel %vm284, %v268, %v300
    %v317 = vsel %vm285, %v269, %v301
    %v318 = vsel %vm286, %v270, %v302
    %v319 = vsel %vm287, %v271, %v303
    %v320 = vsel %vm288, %v272, %v304
    %v321 = vsel %vm289, %v273, %v305
    %v322 = vsel %vm290, %v274, %v306
    %323 = vst [vmem:[%s2] sm:$0xff] %v307
    %324 = vst [vmem:[%s2 + $0x8] sm:$0xff] %v308
    %325 = vst [vmem:[%s2 + $0x10] sm:$0xff] %v309
    %326 = vst [vmem:[%s2 + $0x18] sm:$0xff] %v310
    %327 = vst [vmem:[%s2 + $0x20] sm:$0xff] %v311
    %328 = vst [vmem:[%s2 + $0x28] sm:$0xff] %v312
    %329 = vst [vmem:[%s2 + $0x30] sm:$0xff] %v313
    %330 = vst [vmem:[%s2 + $0x38] sm:$0xff] %v314
    %331 = vst [vmem:[%s2 + $0x40] sm:$0xff] %v315
    %332 = vst [vmem:[%s2 + $0x48] sm:$0xff] %v316
    %333 = vst [vmem:[%s2 + $0x50] sm:$0xff] %v317
    %334 = vst [vmem:[%s2 + $0x58] sm:$0xff] %v318
    %335 = vst [vmem:[%s2 + $0x60] sm:$0xff] %v319
    %336 = vst [vmem:[%s2 + $0x68] sm:$0xff] %v320
    %337 = vst [vmem:[%s2 + $0x70] sm:$0xff] %v321
    %338 = vst [vmem:[%s2 + $0x78] sm:$0xff] %v322
  $region17: #{d_net64_forward.7} parent=0 // pred_fallthru
    _
  // Predicated region
  $region18: #{d_net64_forward.7} parent=0 // pred_check
    _
  $region19: #{d_net64_forward.7} parent=0 // pred_check_branch
    %340 = sbr.rel (0) target = $region21
  $region20: #{d_net64_forward.7} parent=0 // pred_region
    _
  $region21: #{d_net64_forward.7} parent=0 // pred_fallthru
    _
  // Predicated region
  $region22: #{d_net64_forward.7} parent=0 // pred_check
    _
  $region23: #{d_net64_forward.7} parent=0 // pred_check_branch
    %342 = sbr.rel (0) target = $region25
  $region24: #{d_net64_forward.7} parent=0 // pred_region
    _
  $region25: #{d_net64_forward.7} parent=0 // pred_fallthru
    _

// kernel: d_net64_forward.9
$region0: #{d_net64_forward.9}
  #allocation0 [shape = 'u32[]', space=smem, size = 0x4, offset = 0x4, fixed_abs, tag = 'smem constant byte address 0x4 - core index']
  #allocation1 [shape = 'u32[72,128]{1,0:T(1,128)}', space=vmem, size = 0x9000, scoped, tag = 'internal scratch']
  %s0 = inlined_call_operand.vmem [shape: f32[32,128], index: 0, kind: input, shape index: {}]
  %s1 = inlined_call_operand.vmem [shape: f32[1,128], index: 1, kind: input, shape index: {}]
  %s2 = inlined_call_operand.vmem [shape: f32[1,128], index: 2, kind: input, shape index: {}]
  %s3 = inlined_call_operand.vmem [shape: f32[32,128], index: 3, kind: output, shape index: {}]
  %s4 = sld [smem:[#allocation0]]
  $region22: #{d_net64_forward.9} parent=0
    _
  %s6 = ssub.s32 1, %s4
  %s7 = scalar_select 0, %s6, %s4
  // Predicated region
  $region2: #{d_net64_forward.9} parent=0 // pred_check
    _
  $region3: #{d_net64_forward.9} parent=0 // pred_check_branch
    %9 = sbr.rel (0) target = $region5
  $region4: #{d_net64_forward.9} parent=0 // pred_region
    _
  $region5: #{d_net64_forward.9} parent=0 // pred_fallthru
    _
  // Predicated region
  $region6: #{d_net64_forward.9} parent=0 // pred_check
    _
  $region7: #{d_net64_forward.9} parent=0 // pred_check_branch
    %11 = sbr.rel (0) target = $region9
  $region8: #{d_net64_forward.9} parent=0 // pred_region
    _
  $region9: #{d_net64_forward.9} parent=0 // pred_fallthru
    _
  // Predicated region
  $region10: #{d_net64_forward.9} parent=0 // pred_check
    _
  $region11: #{d_net64_forward.9} parent=0 // pred_check_branch
    %13 = sbr.rel (0) target = $region13
  $region12: #{d_net64_forward.9} parent=0 // pred_region
    _
  $region13: #{d_net64_forward.9} parent=0 // pred_fallthru
    _
  %v14 = vld [vmem:[%s0] sm:$0xff]
  %v15 = vld [vmem:[%s0 + $0x8] sm:$0xff]
  %v16 = vld [vmem:[%s0 + $0x10] sm:$0xff]
  %v17 = vld [vmem:[%s0 + $0x18] sm:$0xff]
  %v18 = vld [vmem:[%s1] sm:$0x1]
  %v20 = vperm.slane %v18, 0
  %v22 = vmul.f32 %v14, %v20
  %v23 = vmul.f32 %v15, %v20
  %v24 = vmul.f32 %v16, %v20
  %v25 = vmul.f32 %v17, %v20
  %v26 = vld [vmem:[%s2] sm:$0x1]
  %v28 = vperm.slane %v26, 0
  %v30 = vadd.f32 %v22, %v28
  %v31 = vadd.f32 %v23, %v28
  %v32 = vadd.f32 %v24, %v28
  %v33 = vadd.f32 %v25, %v28
  %vm34 = vcmp.gt.f32.partialorder %v30, 0.0
  %vm35 = vcmp.gt.f32.partialorder %v31, 0.0
  %vm36 = vcmp.gt.f32.partialorder %v32, 0.0
  %vm37 = vcmp.gt.f32.partialorder %v33, 0.0
  %v38 = vmul.f32 %v30, 0.2
  %v39 = vmul.f32 %v31, 0.2
  %v40 = vmul.f32 %v32, 0.2
  %v41 = vmul.f32 %v33, 0.2
  %v42 = vsel %vm34, %v30, %v38
  %v43 = vsel %vm35, %v31, %v39
  %v44 = vsel %vm36, %v32, %v40
  %v45 = vsel %vm37, %v33, %v41
  %46 = vst [vmem:[%s3] sm:$0xff] %v42
  %47 = vst [vmem:[%s3 + $0x8] sm:$0xff] %v43
  %48 = vst [vmem:[%s3 + $0x10] sm:$0xff] %v44
  %49 = vst [vmem:[%s3 + $0x18] sm:$0xff] %v45
  // Predicated region
  $region14: #{d_net64_forward.9} parent=0 // pred_check
    _
  $region15: #{d_net64_forward.9} parent=0 // pred_check_branch
    %51 = sbr.rel (0) target = $region17
  $region16: #{d_net64_forward.9} parent=0 // pred_region
    _
  $region17: #{d_net64_forward.9} parent=0 // pred_fallthru
    _
  // Predicated region
  $region18: #{d_net64_forward.9} parent=0 // pred_check
    _
  $region19: #{d_net64_forward.9} parent=0 // pred_check_branch
    %53 = sbr.rel (0) target = $region21
  $region20: #{d_net64_forward.9} parent=0 // pred_region
    _
  $region21: #{d_net64_forward.9} parent=0 // pred_fallthru
    _

// kernel: d_net64_forward.8
$region0: #{d_net64_forward.8}
  #allocation0 [shape = 'u32[]', space=smem, size = 0x4, offset = 0x4, fixed_abs, tag = 'smem constant byte address 0x4 - core index']
  #allocation1 [shape = 'u32[72,128]{1,0:T(1,128)}', space=vmem, size = 0x9000, scoped, tag = 'internal scratch']
  #allocation2 [shape = 'f32[32,128]{1,0:T(8,128)}', space=vmem, size = 0x4000, scoped, tag = 'scratch operand']
  %s0 = inlined_call_operand.vmem [shape: bf16[32,128], index: 0, kind: input, shape index: {}]
  %s1 = inlined_call_operand.vmem [shape: bf16[128,128], index: 1, kind: input, shape index: {}]
  %s2 = inlined_call_operand.vmem [shape: f32[32,128], index: 2, kind: output, shape index: {0}]
  %s3 = inlined_call_operand.vmem [shape: f32[8,128], index: 3, kind: output, shape index: {1}]
  %4 = xla_tuple %s2, %s3
  %s5 = sld [smem:[#allocation0]]
  $region34: #{d_net64_forward.8} parent=0
    _
  %s7 = ssub.s32 1, %s5
  %s8 = scalar_select 0, %s7, %s5
  // Predicated region
  $region2: #{d_net64_forward.8} parent=0 // pred_check
    _
  $region3: #{d_net64_forward.8} parent=0 // pred_check_branch
    %10 = sbr.rel (0) target = $region5
  $region4: #{d_net64_forward.8} parent=0 // pred_region
    _
  $region5: #{d_net64_forward.8} parent=0 // pred_fallthru
    _
  // Predicated region
  $region6: #{d_net64_forward.8} parent=0 // pred_check
    _
  $region7: #{d_net64_forward.8} parent=0 // pred_check_branch
    %12 = sbr.rel (0) target = $region9
  $region8: #{d_net64_forward.8} parent=0 // pred_region
    _
  $region9: #{d_net64_forward.8} parent=0 // pred_fallthru
    _
  %p13 = scmp.eq.s32.totalorder 0, 0
  // Predicated region
  $region10: #{d_net64_forward.8} parent=0 // pred_check
    %p14 = pneg %p13
  $region11: #{d_net64_forward.8} parent=0 // pred_check_branch
    %16 = sbr.rel (%p14) target = $region13
  $region12: #{d_net64_forward.8} parent=0 // pred_region
    %17 = vst [vmem:[#allocation2] sm:$0xff] 0.0
    %18 = vst [vmem:[#allocation2 + $0x8] sm:$0xff] 0.0
    %19 = vst [vmem:[#allocation2 + $0x10] sm:$0xff] 0.0
    %20 = vst [vmem:[#allocation2 + $0x18] sm:$0xff] 0.0
  $region13: #{d_net64_forward.8} parent=0 // pred_fallthru
    _
  %v21 = vld [vmem:[#allocation2] sm:$0xff]
  %v22 = vld [vmem:[#allocation2 + $0x8] sm:$0xff]
  %v23 = vld [vmem:[#allocation2 + $0x10] sm:$0xff]
  %v24 = vld [vmem:[#allocation2 + $0x18] sm:$0xff]
  %v25 = vld [vmem:[%s0] sm:$0xf]
  %v26 = vld [vmem:[%s0 + $0x4] sm:$0xf]
  %v27 = vld [vmem:[%s0 + $0x8] sm:$0xf]
  %v28 = vld [vmem:[%s0 + $0xc] sm:$0xf]
  %v29 = vld [vmem:[%s1] sm:$0xf]
  %v30 = vld [vmem:[%s1 + $0x4] sm:$0xf]
  %v31 = vld [vmem:[%s1 + $0x8] sm:$0xf]
  %v32 = vld [vmem:[%s1 + $0xc] sm:$0xf]
  %v33 = vld [vmem:[%s1 + $0x10] sm:$0xf]
  %v34 = vld [vmem:[%s1 + $0x14] sm:$0xf]
  %v35 = vld [vmem:[%s1 + $0x18] sm:$0xf]
  %v36 = vld [vmem:[%s1 + $0x1c] sm:$0xf]
  %v37 = vld [vmem:[%s1 + $0x20] sm:$0xf]
  %v38 = vld [vmem:[%s1 + $0x24] sm:$0xf]
  %v39 = vld [vmem:[%s1 + $0x28] sm:$0xf]
  %v40 = vld [vmem:[%s1 + $0x2c] sm:$0xf]
  %v41 = vld [vmem:[%s1 + $0x30] sm:$0xf]
  %v42 = vld [vmem:[%s1 + $0x34] sm:$0xf]
  %v43 = vld [vmem:[%s1 + $0x38] sm:$0xf]
  %v44 = vld [vmem:[%s1 + $0x3c] sm:$0xf]
  %v49 = vunpack.c.l.b16 %v25
  %v50 = vunpack.c.l.b16 %v26
  %v51 = vunpack.c.l.b16 %v27
  %v52 = vunpack.c.l.b16 %v28
  %v53 = vpack.c.b16 %v50, %v49
  %v54 = vpack.c.b16 %v52, %v51
  %v73 = vunpack.c.l.b16 %v29
  %v74 = vunpack.c.l.b16 %v30
  %v75 = vunpack.c.l.b16 %v31
  %v76 = vunpack.c.l.b16 %v32
  %v77 = vunpack.c.l.b16 %v33
  %v78 = vunpack.c.l.b16 %v34
  %v79 = vunpack.c.l.b16 %v35
  %v80 = vunpack.c.l.b16 %v36
  %v81 = vunpack.c.l.b16 %v37
  %v82 = vunpack.c.l.b16 %v38
  %v83 = vunpack.c.l.b16 %v39
  %v84 = vunpack.c.l.b16 %v40
  %v85 = vunpack.c.l.b16 %v41
  %v86 = vunpack.c.l.b16 %v42
  %v87 = vunpack.c.l.b16 %v43
  %v88 = vunpack.c.l.b16 %v44
  %v89 = vpack.c.b16 %v74, %v73
  %v90 = vpack.c.b16 %v76, %v75
  %v91 = vpack.c.b16 %v78, %v77
  %v92 = vpack.c.b16 %v80, %v79
  %v93 = vpack.c.b16 %v82, %v81
  %v94 = vpack.c.b16 %v84, %v83
  %v95 = vpack.c.b16 %v86, %v85
  %v96 = vpack.c.b16 %v88, %v87
  %105 = vmatpush.bf16.msra.mxu0 %v96
  %106 = vmatpush.bf16.msra.mxu0 %v95
  %107 = vmatpush.bf16.msra.mxu0 %v94
  %108 = vmatpush.bf16.msra.mxu0 %v93
  %109 = vmatpush.bf16.msra.mxu0 %v92
  %110 = vmatpush.bf16.msra.mxu0 %v91
  %111 = vmatpush.bf16.msra.mxu0 %v90
  %112 = vmatpush.bf16.msra.mxu0 %v89
  %113 = vmatmul.bf16.gmra.mxu0 %v53
  %v114 = vpop.f32.mrf.mxu0
  %v115 = vadd.f32 0.0, %v114
  %v116 = vpop.f32.mrf.mxu0
  %v117 = vadd.f32 0.0, %v116
  %118 = vmatmul.bf16.gmra.mxu0 %v54
  %v119 = vpop.f32.mrf.mxu0
  %v120 = vadd.f32 0.0, %v119
  %v121 = vpop.f32.mrf.mxu0
  %v122 = vadd.f32 0.0, %v121
  %123 = vdwg.mxu0
  %v124 = vadd.f32 %v21, %v115
  %v125 = vadd.f32 %v22, %v117
  %v126 = vadd.f32 %v23, %v120
  %v127 = vadd.f32 %v24, %v122
  %128 = vst [vmem:[#allocation2] sm:$0xff] %v124
  %129 = vst [vmem:[#allocation2 + $0x8] sm:$0xff] %v125
  %130 = vst [vmem:[#allocation2 + $0x10] sm:$0xff] %v126
  %131 = vst [vmem:[#allocation2 + $0x18] sm:$0xff] %v127
  // Predicated region
  $region14: #{d_net64_forward.8} parent=0 // pred_check
    %p132 = pneg %p13
  $region15: #{d_net64_forward.8} parent=0 // pred_check_branch
    %134 = sbr.rel (%p132) target = $region17
  $region16: #{d_net64_forward.8} parent=0 // pred_region
    %v135 = vld [vmem:[#allocation2] sm:$0xff]
    %v136 = vld [vmem:[#allocation2 + $0x8] sm:$0xff]
    %v137 = vld [vmem:[#allocation2 + $0x10] sm:$0xff]
    %v138 = vld [vmem:[#allocation2 + $0x18] sm:$0xff]
    %139 = vst [vmem:[%s2] sm:$0xff] %v135
    %140 = vst [vmem:[%s2 + $0x8] sm:$0xff] %v136
    %141 = vst [vmem:[%s2 + $0x10] sm:$0xff] %v137
    %142 = vst [vmem:[%s2 + $0x18] sm:$0xff] %v138
    %v143 = vadd.f32 %v135, %v136
    %v144 = vadd.f32 %v143, %v137
    %v145 = vadd.f32 %v144, %v138
    %v146 = vrot.slane %v145, 4
    %v147 = vadd.f32 %v145, %v146
    %v148 = vrot.slane %v147, 2
    %v149 = vadd.f32 %v147, %v148
    %v150 = vrot.slane %v149, 1
    %v151 = vadd.f32 %v149, %v150
    %v152 = vmul.f32 %v135, %v135
    %v153 = vmul.f32 %v136, %v136
    %v154 = vmul.f32 %v137, %v137
    %v155 = vmul.f32 %v138, %v138
    %v156 = vadd.f32 %v152, %v153
    %v157 = vadd.f32 %v156, %v154
    %v158 = vadd.f32 %v157, %v155
    %v159 = vrot.slane %v158, 4
    %v160 = vadd.f32 %v158, %v159
    %v161 = vrot.slane %v160, 2
    %v162 = vadd.f32 %v160, %v161
    %v163 = vrot.slane %v162, 1
    %v164 = vadd.f32 %v162, %v163
    %v165 = vlaneseq
    %v166 = vshrl.u32 %v165, 7
    %vm167 = vcmp.eq.s32.totalorder %v166, 0
    %vm168 = vcmp.eq.s32.totalorder %v166, 1
    %v169 = vsel %vm168, %v164, 0.0
    %v170 = vsel %vm167, %v151, %v169
    %171 = vst [vmem:[%s3] sm:$0xff] %v170
  $region17: #{d_net64_forward.8} parent=0 // pred_fallthru
    _
  // Predicated region
  $region18: #{d_net64_forward.8} parent=0 // pred_check
    _
  $region19: #{d_net64_forward.8} parent=0 // pred_check_branch
    %173 = sbr.rel (0) target = $region21
  $region20: #{d_net64_forward.8} parent=0 // pred_region
    _
  $region21: #{d_net64_forward.8} parent=0 // pred_fallthru
    _
  // Predicated region
  $region22: #{d_net64_forward.8} parent=0 // pred_check
    _
  $region23: #{d_net64_forward.8} parent=0 // pred_check_branch
    %175 = sbr.rel (0) target = $region25
  $region24: #{d_net64_forward.8} parent=0 // pred_region
    _
  $region25: #{d_net64_forward.8} parent=0 // pred_fallthru
    _
  // Predicated region
  $region26: #{d_net64_forward.8} parent=0 // pred_check
    _
  $region27: #{d_net64_forward.8} parent=0 // pred_check_branch
    %177 = sbr.rel (0) target = $region29
  $region28: #{d_net64_forward.8} parent=0 // pred_region
    _
  $region29: #{d_net64_forward.8} parent=0 // pred_fallthru
    _
  // Predicated region
  $region30: #{d_net64_forward.8} parent=0 // pred_check
    _
  $region31: #{d_net64_forward.8} parent=0 // pred_check_branch
    %179 = sbr.rel (0) target = $region33
  $region32: #{d_net64_forward.8} parent=0 // pred_region
    _
  $region33: #{d_net64_forward.8} parent=0 // pred_fallthru
    _

// kernel: d_net64_forward.11
$region0: #{d_net64_forward.11}
  #allocation0 [shape = 'u32[]', space=smem, size = 0x4, offset = 0x4, fixed_abs, tag = 'smem constant byte address 0x4 - core index']
  #allocation1 [shape = 'u32[72,128]{1,0:T(1,128)}', space=vmem, size = 0x9000, scoped, tag = 'internal scratch']
  %s0 = inlined_call_operand.vmem [shape: f32[8,128], index: 0, kind: input, shape index: {}]
  %s1 = inlined_call_operand.vmem [shape: f32[1,128], index: 1, kind: input, shape index: {}]
  %s2 = inlined_call_operand.vmem [shape: f32[1,128], index: 2, kind: input, shape index: {}]
  %s3 = inlined_call_operand.vmem [shape: f32[8,128], index: 3, kind: output, shape index: {}]
  %s4 = sld [smem:[#allocation0]]
  $region22: #{d_net64_forward.11} parent=0
    _
  %s6 = ssub.s32 1, %s4
  %s7 = scalar_select 0, %s6, %s4
  // Predicated region
  $region2: #{d_net64_forward.11} parent=0 // pred_check
    _
  $region3: #{d_net64_forward.11} parent=0 // pred_check_branch
    %9 = sbr.rel (0) target = $region5
  $region4: #{d_net64_forward.11} parent=0 // pred_region
    _
  $region5: #{d_net64_forward.11} parent=0 // pred_fallthru
    _
  // Predicated region
  $region6: #{d_net64_forward.11} parent=0 // pred_check
    _
  $region7: #{d_net64_forward.11} parent=0 // pred_check_branch
    %11 = sbr.rel (0) target = $region9
  $region8: #{d_net64_forward.11} parent=0 // pred_region
    _
  $region9: #{d_net64_forward.11} parent=0 // pred_fallthru
    _
  // Predicated region
  $region10: #{d_net64_forward.11} parent=0 // pred_check
    _
  $region11: #{d_net64_forward.11} parent=0 // pred_check_branch
    %13 = sbr.rel (0) target = $region13
  $region12: #{d_net64_forward.11} parent=0 // pred_region
    _
  $region13: #{d_net64_forward.11} parent=0 // pred_fallthru
    _
  %v14 = vld [vmem:[%s0] sm:$0xff]
  %v15 = vld [vmem:[%s1] sm:$0x1]
  %v17 = vperm.slane %v15, 0
  %v19 = vmul.f32 %v14, %v17
  %v20 = vld [vmem:[%s2] sm:$0x1]
  %v22 = vperm.slane %v20, 0
  %v24 = vadd.f32 %v19, %v22
  %vm25 = vcmp.gt.f32.partialorder %v24, 0.0
  %v26 = vmul.f32 %v24, 0.2
  %v27 = vsel %vm25, %v24, %v26
  %28 = vst [vmem:[%s3] sm:$0xff] %v27
  // Predicated region
  $region14: #{d_net64_forward.11} parent=0 // pred_check
    _
  $region15: #{d_net64_forward.11} parent=0 // pred_check_branch
    %30 = sbr.rel (0) target = $region17
  $region16: #{d_net64_forward.11} parent=0 // pred_region
    _
  $region17: #{d_net64_forward.11} parent=0 // pred_fallthru
    _
  // Predicated region
  $region18: #{d_net64_forward.11} parent=0 // pred_check
    _
  $region19: #{d_net64_forward.11} parent=0 // pred_check_branch
    %32 = sbr.rel (0) target = $region21
  $region20: #{d_net64_forward.11} parent=0 // pred_region
    _
  $region21: #{d_net64_forward.11} parent=0 // pred_fallthru
    _

// kernel: d_net64_forward.10
$region0: #{d_net64_forward.10}
  #allocation0 [shape = 'u32[]', space=smem, size = 0x4, offset = 0x4, fixed_abs, tag = 'smem constant byte address 0x4 - core index']
  #allocation1 [shape = 'u32[72,128]{1,0:T(1,128)}', space=vmem, size = 0x9000, scoped, tag = 'internal scratch']
  #allocation2 [shape = 'f32[8,128]{1,0:T(8,128)}', space=vmem, size = 0x1000, scoped, tag = 'scratch operand']
  %s0 = inlined_call_operand.vmem [shape: bf16[8,256], index: 0, kind: input, shape index: {}]
  %s1 = inlined_call_operand.vmem [shape: bf16[256,128], index: 1, kind: input, shape index: {}]
  %s2 = inlined_call_operand.vmem [shape: f32[8,128], index: 2, kind: output, shape index: {0}]
  %s3 = inlined_call_operand.vmem [shape: f32[8,128], index: 3, kind: output, shape index: {1}]
  %4 = xla_tuple %s2, %s3
  %s5 = sld [smem:[#allocation0]]
  $region34: #{d_net64_forward.10} parent=0
    _
  %s7 = ssub.s32 1, %s5
  %s8 = scalar_select 0, %s7, %s5
  // Predicated region
  $region2: #{d_net64_forward.10} parent=0 // pred_check
    _
  $region3: #{d_net64_forward.10} parent=0 // pred_check_branch
    %10 = sbr.rel (0) target = $region5
  $region4: #{d_net64_forward.10} parent=0 // pred_region
    _
  $region5: #{d_net64_forward.10} parent=0 // pred_fallthru
    _
  // Predicated region
  $region6: #{d_net64_forward.10} parent=0 // pred_check
    _
  $region7: #{d_net64_forward.10} parent=0 // pred_check_branch
    %12 = sbr.rel (0) target = $region9
  $region8: #{d_net64_forward.10} parent=0 // pred_region
    _
  $region9: #{d_net64_forward.10} parent=0 // pred_fallthru
    _
  %p13 = scmp.eq.s32.totalorder 0, 0
  // Predicated region
  $region10: #{d_net64_forward.10} parent=0 // pred_check
    %p14 = pneg %p13
  $region11: #{d_net64_forward.10} parent=0 // pred_check_branch
    %16 = sbr.rel (%p14) target = $region13
  $region12: #{d_net64_forward.10} parent=0 // pred_region
    %17 = vst [vmem:[#allocation2] sm:$0xff] 0.0
  $region13: #{d_net64_forward.10} parent=0 // pred_fallthru
    _
  %v18 = vld [vmem:[#allocation2] sm:$0xff]
  %v19 = vld [vmem:[%s0] sm:$0xff]
  %v20 = vld [vmem:[%s1] sm:$0xf]
  %v21 = vld [vmem:[%s1 + $0x4] sm:$0xf]
  %v22 = vld [vmem:[%s1 + $0x8] sm:$0xf]
  %v23 = vld [vmem:[%s1 + $0xc] sm:$0xf]
  %v24 = vld [vmem:[%s1 + $0x10] sm:$0xf]
  %v25 = vld [vmem:[%s1 + $0x14] sm:$0xf]
  %v26 = vld [vmem:[%s1 + $0x18] sm:$0xf]
  %v27 = vld [vmem:[%s1 + $0x1c] sm:$0xf]
  %v28 = vld [vmem:[%s1 + $0x20] sm:$0xf]
  %v29 = vld [vmem:[%s1 + $0x24] sm:$0xf]
  %v30 = vld [vmem:[%s1 + $0x28] sm:$0xf]
  %v31 = vld [vmem:[%s1 + $0x2c] sm:$0xf]
  %v32 = vld [vmem:[%s1 + $0x30] sm:$0xf]
  %v33 = vld [vmem:[%s1 + $0x34] sm:$0xf]
  %v34 = vld [vmem:[%s1 + $0x38] sm:$0xf]
  %v35 = vld [vmem:[%s1 + $0x3c] sm:$0xf]
  %v36 = vld [vmem:[%s1 + $0x40] sm:$0xf]
  %v37 = vld [vmem:[%s1 + $0x44] sm:$0xf]
  %v38 = vld [vmem:[%s1 + $0x48] sm:$0xf]
  %v39 = vld [vmem:[%s1 + $0x4c] sm:$0xf]
  %v40 = vld [vmem:[%s1 + $0x50] sm:$0xf]
  %v41 = vld [vmem:[%s1 + $0x54] sm:$0xf]
  %v42 = vld [vmem:[%s1 + $0x58] sm:$0xf]
  %v43 = vld [vmem:[%s1 + $0x5c] sm:$0xf]
  %v44 = vld [vmem:[%s1 + $0x60] sm:$0xf]
  %v45 = vld [vmem:[%s1 + $0x64] sm:$0xf]
  %v46 = vld [vmem:[%s1 + $0x68] sm:$0xf]
  %v47 = vld [vmem:[%s1 + $0x6c] sm:$0xf]
  %v48 = vld [vmem:[%s1 + $0x70] sm:$0xf]
  %v49 = vld [vmem:[%s1 + $0x74] sm:$0xf]
  %v50 = vld [vmem:[%s1 + $0x78] sm:$0xf]
  %v51 = vld [vmem:[%s1 + $0x7c] sm:$0xf]
  %v53 = vunpack.c.l.b16 %v19
  %v54 = vunpack.c.h.b16 %v19
  %v55 = vpack.c.b16 %v53, %v53
  %v56 = vpack.c.b16 %v54, %v54
  %v91 = vunpack.c.l.b16 %v20
  %v92 = vunpack.c.l.b16 %v21
  %v93 = vunpack.c.l.b16 %v22
  %v94 = vunpack.c.l.b16 %v23
  %v95 = vunpack.c.l.b16 %v24
  %v96 = vunpack.c.l.b16 %v25
  %v97 = vunpack.c.l.b16 %v26
  %v98 = vunpack.c.l.b16 %v27
  %v99 = vunpack.c.l.b16 %v28
  %v100 = vunpack.c.l.b16 %v29
  %v101 = vunpack.c.l.b16 %v30
  %v102 = vunpack.c.l.b16 %v31
  %v103 = vunpack.c.l.b16 %v32
  %v104 = vunpack.c.l.b16 %v33
  %v105 = vunpack.c.l.b16 %v34
  %v106 = vunpack.c.l.b16 %v35
  %v107 = vunpack.c.l.b16 %v36
  %v108 = vunpack.c.l.b16 %v37
  %v109 = vunpack.c.l.b16 %v38
  %v110 = vunpack.c.l.b16 %v39
  %v111 = vunpack.c.l.b16 %v40
  %v112 = vunpack.c.l.b16 %v41
  %v113 = vunpack.c.l.b16 %v42
  %v114 = vunpack.c.l.b16 %v43
  %v115 = vunpack.c.l.b16 %v44
  %v116 = vunpack.c.l.b16 %v45
  %v117 = vunpack.c.l.b16 %v46
  %v118 = vunpack.c.l.b16 %v47
  %v119 = vunpack.c.l.b16 %v48
  %v120 = vunpack.c.l.b16 %v49
  %v121 = vunpack.c.l.b16 %v50
  %v122 = vunpack.c.l.b16 %v51
  %v123 = vpack.c.b16 %v92, %v91
  %v124 = vpack.c.b16 %v94, %v93
  %v125 = vpack.c.b16 %v96, %v95
  %v126 = vpack.c.b16 %v98, %v97
  %v127 = vpack.c.b16 %v100, %v99
  %v128 = vpack.c.b16 %v102, %v101
  %v129 = vpack.c.b16 %v104, %v103
  %v130 = vpack.c.b16 %v106, %v105
  %v131 = vpack.c.b16 %v108, %v107
  %v132 = vpack.c.b16 %v110, %v109
  %v133 = vpack.c.b16 %v112, %v111
  %v134 = vpack.c.b16 %v114, %v113
  %v135 = vpack.c.b16 %v116, %v115
  %v136 = vpack.c.b16 %v118, %v117
  %v137 = vpack.c.b16 %v120, %v119
  %v138 = vpack.c.b16 %v122, %v121
  %155 = vmatpush.bf16.msra.mxu0 %v130
  %156 = vmatpush.bf16.msra.mxu0 %v129
  %157 = vmatpush.bf16.msra.mxu0 %v128
  %158 = vmatpush.bf16.msra.mxu0 %v127
  %159 = vmatpush.bf16.msra.mxu0 %v126
  %160 = vmatpush.bf16.msra.mxu0 %v125
  %161 = vmatpush.bf16.msra.mxu0 %v124
  %162 = vmatpush.bf16.msra.mxu0 %v123
  %163 = vmatmul.bf16.gmra.mxu0 %v55
  %v164 = vpop.f32.mrf.mxu0
  %v165 = vadd.f32 0.0, %v164
  %v166 = vpop.f32.mrf.mxu0
  %167 = vdwg.mxu0
  %168 = vmatpush.bf16.msra.mxu0 %v138
  %169 = vmatpush.bf16.msra.mxu0 %v137
  %170 = vmatpush.bf16.msra.mxu0 %v136
  %171 = vmatpush.bf16.msra.mxu0 %v135
  %172 = vmatpush.bf16.msra.mxu0 %v134
  %173 = vmatpush.bf16.msra.mxu0 %v133
  %174 = vmatpush.bf16.msra.mxu0 %v132
  %175 = vmatpush.bf16.msra.mxu0 %v131
  %176 = vmatmul.bf16.gmra.mxu0 %v56
  %v177 = vpop.f32.mrf.mxu0
  %v178 = vadd.f32 %v165, %v177
  %v179 = vpop.f32.mrf.mxu0
  %180 = vdwg.mxu0
  %v181 = vadd.f32 %v18, %v178
  %182 = vst [vmem:[#allocation2] sm:$0xff] %v181
  // Predicated region
  $region14: #{d_net64_forward.10} parent=0 // pred_check
    %p183 = pneg %p13
  $region15: #{d_net64_forward.10} parent=0 // pred_check_branch
    %185 = sbr.rel (%p183) target = $region17
  $region16: #{d_net64_forward.10} parent=0 // pred_region
    %v186 = vld [vmem:[#allocation2] sm:$0xff]
    %187 = vst [vmem:[%s2] sm:$0xff] %v186
    %v188 = vrot.slane %v186, 4
    %v189 = vadd.f32 %v186, %v188
    %v190 = vrot.slane %v189, 2
    %v191 = vadd.f32 %v189, %v190
    %v192 = vrot.slane %v191, 1
    %v193 = vadd.f32 %v191, %v192
    %v194 = vmul.f32 %v186, %v186
    %v195 = vrot.slane %v194, 4
    %v196 = vadd.f32 %v194, %v195
    %v197 = vrot.slane %v196, 2
    %v198 = vadd.f32 %v196, %v197
    %v199 = vrot.slane %v198, 1
    %v200 = vadd.f32 %v198, %v199
    %v201 = vlaneseq
    %v202 = vshrl.u32 %v201, 7
    %vm203 = vcmp.eq.s32.totalorder %v202, 0
    %vm204 = vcmp.eq.s32.totalorder %v202, 1
    %v205 = vsel %vm204, %v200, 0.0
    %v206 = vsel %vm203, %v193, %v205
    %207 = vst [vmem:[%s3] sm:$0xff] %v206
  $region17: #{d_net64_forward.10} parent=0 // pred_fallthru
    _
  // Predicated region
  $region18: #{d_net64_forward.10} parent=0 // pred_check
    _
  $region19: #{d_net64_forward.10} parent=0 // pred_check_branch
    %209 = sbr.rel (0) target = $region21
  $region20: #{d_net64_forward.10} parent=0 // pred_region
    _
  $region21: #{d_net64_forward.10} parent=0 // pred_fallthru
    _
  // Predicated region
  $region22: #{d_net64_forward.10} parent=0 // pred_check
    _
  $region23: #{d_net64_forward.10} parent=0 // pred_check_branch
    %211 = sbr.rel (0) target = $region25
  $region24: #{d_net64_forward.10} parent=0 // pred_region
    _
  $region25: #{d_net64_forward.10} parent=0 // pred_fallthru
    _
  // Predicated region
  $region26: #{d_net64_forward.10} parent=0 // pred_check
    _
  $region27: #{d_net64_forward.10} parent=0 // pred_check_branch
    %213 = sbr.rel (0) target = $region29
  $region28: #{d_net64_forward.10} parent=0 // pred_region
    _
  $region29: #{d_net64_forward.10} parent=0 // pred_fallthru
    _
  // Predicated region
  $region30: #{d_net64_forward.10} parent=0 // pred_check
    _
  $region31: #{d_net64_forward.10} parent=0 // pred_check_branch
    %215 = sbr.rel (0) target = $region33
  $region32: #{d_net64_forward.10} parent=0 // pred_region
    _
  $region33: #{d_net64_forward.10} parent=0 // pred_fallthru
    _

// kernel: d_net64_forward.12
$region0: #{d_net64_forward.12}
  #allocation0 [shape = 'u32[]', space=smem, size = 0x4, offset = 0x4, fixed_abs, tag = 'smem constant byte address 0x4 - core index']
  #allocation1 [shape = 'u32[72,128]{1,0:T(1,128)}', space=vmem, size = 0x9000, scoped, tag = 'internal scratch']
  #allocation2 [shape = 'f32[8,128]{1,0:T(8,128)}', space=vmem, size = 0x1000, scoped, tag = 'scratch operand']
  %s0 = inlined_call_operand.vmem [shape: bf16[8,512], index: 0, kind: input, shape index: {}]
  %s1 = inlined_call_operand.vmem [shape: bf16[512,128], index: 1, kind: input, shape index: {}]
  %s2 = inlined_call_operand.vmem [shape: f32[8,128], index: 2, kind: output, shape index: {0}]
  %s3 = inlined_call_operand.vmem [shape: f32[8,128], index: 3, kind: output, shape index: {1}]
  %4 = xla_tuple %s2, %s3
  %s5 = sld [smem:[#allocation0]]
  $region34: #{d_net64_forward.12} parent=0
    _
  %s7 = ssub.s32 1, %s5
  %s8 = scalar_select 0, %s7, %s5
  // Predicated region
  $region2: #{d_net64_forward.12} parent=0 // pred_check
    _
  $region3: #{d_net64_forward.12} parent=0 // pred_check_branch
    %10 = sbr.rel (0) target = $region5
  $region4: #{d_net64_forward.12} parent=0 // pred_region
    _
  $region5: #{d_net64_forward.12} parent=0 // pred_fallthru
    _
  // Predicated region
  $region6: #{d_net64_forward.12} parent=0 // pred_check
    _
  $region7: #{d_net64_forward.12} parent=0 // pred_check_branch
    %12 = sbr.rel (0) target = $region9
  $region8: #{d_net64_forward.12} parent=0 // pred_region
    _
  $region9: #{d_net64_forward.12} parent=0 // pred_fallthru
    _
  %p13 = scmp.eq.s32.totalorder 0, 0
  // Predicated region
  $region10: #{d_net64_forward.12} parent=0 // pred_check
    %p14 = pneg %p13
  $region11: #{d_net64_forward.12} parent=0 // pred_check_branch
    %16 = sbr.rel (%p14) target = $region13
  $region12: #{d_net64_forward.12} parent=0 // pred_region
    %17 = vst [vmem:[#allocation2] sm:$0xff] 0.0
  $region13: #{d_net64_forward.12} parent=0 // pred_fallthru
    _
  %v18 = vld [vmem:[#allocation2] sm:$0xff]
  %v19 = vld [vmem:[%s0] sm:$0xff]
  %v20 = vld [vmem:[%s0 + $0x8] sm:$0xff]
  %v21 = vld [vmem:[%s1] sm:$0xf]
  %v22 = vld [vmem:[%s1 + $0x4] sm:$0xf]
  %v23 = vld [vmem:[%s1 + $0x8] sm:$0xf]
  %v24 = vld [vmem:[%s1 + $0xc] sm:$0xf]
  %v25 = vld [vmem:[%s1 + $0x10] sm:$0xf]
  %v26 = vld [vmem:[%s1 + $0x14] sm:$0xf]
  %v27 = vld [vmem:[%s1 + $0x18] sm:$0xf]
  %v28 = vld [vmem:[%s1 + $0x1c] sm:$0xf]
  %v29 = vld [vmem:[%s1 + $0x20] sm:$0xf]
  %v30 = vld [vmem:[%s1 + $0x24] sm:$0xf]
  %v31 = vld [vmem:[%s1 + $0x28] sm:$0xf]
  %v32 = vld [vmem:[%s1 + $0x2c] sm:$0xf]
  %v33 = vld [vmem:[%s1 + $0x30] sm:$0xf]
  %v34 = vld [vmem:[%s1 + $0x34] sm:$0xf]
  %v35 = vld [vmem:[%s1 + $0x38] sm:$0xf]
  %v36 = vld [vmem:[%s1 + $0x3c] sm:$0xf]
  %v37 = vld [vmem:[%s1 + $0x40] sm:$0xf]
  %v38 = vld [vmem:[%s1 + $0x44] sm:$0xf]
  %v39 = vld [vmem:[%s1 + $0x48] sm:$0xf]
  %v40 = vld [vmem:[%s1 + $0x4c] sm:$0xf]
  %v41 = vld [vmem:[%s1 + $0x50] sm:$0xf]
  %v42 = vld [vmem:[%s1 + $0x54] sm:$0xf]
  %v43 = vld [vmem:[%s1 + $0x58] sm:$0xf]
  %v44 = vld [vmem:[%s1 + $0x5c] sm:$0xf]
  %v45 = vld [vmem:[%s1 + $0x60] sm:$0xf]
  %v46 = vld [vmem:[%s1 + $0x64] sm:$0xf]
  %v47 = vld [vmem:[%s1 + $0x68] sm:$0xf]
  %v48 = vld [vmem:[%s1 + $0x6c] sm:$0xf]
  %v49 = vld [vmem:[%s1 + $0x70] sm:$0xf]
  %v50 = vld [vmem:[%s1 + $0x74] sm:$0xf]
  %v51 = vld [vmem:[%s1 + $0x78] sm:$0xf]
  %v52 = vld [vmem:[%s1 + $0x7c] sm:$0xf]
  %v53 = vld [vmem:[%s1 + $0x80] sm:$0xf]
  %v54 = vld [vmem:[%s1 + $0x84] sm:$0xf]
  %v55 = vld [vmem:[%s1 + $0x88] sm:$0xf]
  %v56 = vld [vmem:[%s1 + $0x8c] sm:$0xf]
  %v57 = vld [vmem:[%s1 + $0x90] sm:$0xf]
  %v58 = vld [vmem:[%s1 + $0x94] sm:$0xf]
  %v59 = vld [vmem:[%s1 + $0x98] sm:$0xf]
  %v60 = vld [vmem:[%s1 + $0x9c] sm:$0xf]
  %v61 = vld [vmem:[%s1 + $0xa0] sm:$0xf]
  %v62 = vld [vmem:[%s1 + $0xa4] sm:$0xf]
  %v63 = vld [vmem:[%s1 + $0xa8] sm:$0xf]
  %v64 = vld [vmem:[%s1 + $0xac] sm:$0xf]
  %v65 = vld [vmem:[%s1 + $0xb0] sm:$0xf]
  %v66 = vld [vmem:[%s1 + $0xb4] sm:$0xf]
  %v67 = vld [vmem:[%s1 + $0xb8] sm:$0xf]
  %v68 = vld [vmem:[%s1 + $0xbc] sm:$0xf]
  %v69 = vld [vmem:[%s1 + $0xc0] sm:$0xf]
  %v70 = vld [vmem:[%s1 + $0xc4] sm:$0xf]
  %v71 = vld [vmem:[%s1 + $0xc8] sm:$0xf]
  %v72 = vld [vmem:[%s1 + $0xcc] sm:$0xf]
  %v73 = vld [vmem:[%s1 + $0xd0] sm:$0xf]
  %v74 = vld [vmem:[%s1 + $0xd4] sm:$0xf]
  %v75 = vld [vmem:[%s1 + $0xd8] sm:$0xf]
  %v76 = vld [vmem:[%s1 + $0xdc] sm:$0xf]
  %v77 = vld [vmem:[%s1 + $0xe0] sm:$0xf]
  %v78 = vld [vmem:[%s1 + $0xe4] sm:$0xf]
  %v79 = vld [vmem:[%s1 + $0xe8] sm:$0xf]
  %v80 = vld [vmem:[%s1 + $0xec] sm:$0xf]
  %v81 = vld [vmem:[%s1 + $0xf0] sm:$0xf]
  %v82 = vld [vmem:[%s1 + $0xf4] sm:$0xf]
  %v83 = vld [vmem:[%s1 + $0xf8] sm:$0xf]
  %v84 = vld [vmem:[%s1 + $0xfc] sm:$0xf]
  %v87 = vunpack.c.l.b16 %v19
  %v88 = vunpack.c.h.b16 %v19
  %v89 = vunpack.c.l.b16 %v20
  %v90 = vunpack.c.h.b16 %v20
  %v91 = vpack.c.b16 %v87, %v87
  %v92 = vpack.c.b16 %v88, %v88
  %v93 = vpack.c.b16 %v89, %v89
  %v94 = vpack.c.b16 %v90, %v90
  %v163 = vunpack.c.l.b16 %v21
  %v164 = vunpack.c.l.b16 %v22
  %v165 = vunpack.c.l.b16 %v23
  %v166 = vunpack.c.l.b16 %v24
  %v167 = vunpack.c.l.b16 %v25
  %v168 = vunpack.c.l.b16 %v26
  %v169 = vunpack.c.l.b16 %v27
  %v170 = vunpack.c.l.b16 %v28
  %v171 = vunpack.c.l.b16 %v29
  %v172 = vunpack.c.l.b16 %v30
  %v173 = vunpack.c.l.b16 %v31
  %v174 = vunpack.c.l.b16 %v32
  %v175 = vunpack.c.l.b16 %v33
  %v176 = vunpack.c.l.b16 %v34
  %v177 = vunpack.c.l.b16 %v35
  %v178 = vunpack.c.l.b16 %v36
  %v179 = vunpack.c.l.b16 %v37
  %v180 = vunpack.c.l.b16 %v38
  %v181 = vunpack.c.l.b16 %v39
  %v182 = vunpack.c.l.b16 %v40
  %v183 = vunpack.c.l.b16 %v41
  %v184 = vunpack.c.l.b16 %v42
  %v185 = vunpack.c.l.b16 %v43
  %v186 = vunpack.c.l.b16 %v44
  %v187 = vunpack.c.l.b16 %v45
  %v188 = vunpack.c.l.b16 %v46
  %v189 = vunpack.c.l.b16 %v47
  %v190 = vunpack.c.l.b16 %v48
  %v191 = vunpack.c.l.b16 %v49
  %v192 = vunpack.c.l.b16 %v50
  %v193 = vunpack.c.l.b16 %v51
  %v194 = vunpack.c.l.b16 %v52
  %v195 = vunpack.c.l.b16 %v53
  %v196 = vunpack.c.l.b16 %v54
  %v197 = vunpack.c.l.b16 %v55
  %v198 = vunpack.c.l.b16 %v56
  %v199 = vunpack.c.l.b16 %v57
  %v200 = vunpack.c.l.b16 %v58
  %v201 = vunpack.c.l.b16 %v59
  %v202 = vunpack.c.l.b16 %v60
  %v203 = vunpack.c.l.b16 %v61
  %v204 = vunpack.c.l.b16 %v62
  %v205 = vunpack.c.l.b16 %v63
  %v206 = vunpack.c.l.b16 %v64
  %v207 = vunpack.c.l.b16 %v65
  %v208 = vunpack.c.l.b16 %v66
  %v209 = vunpack.c.l.b16 %v67
  %v210 = vunpack.c.l.b16 %v68
  %v211 = vunpack.c.l.b16 %v69
  %v212 = vunpack.c.l.b16 %v70
  %v213 = vunpack.c.l.b16 %v71
  %v214 = vunpack.c.l.b16 %v72
  %v215 = vunpack.c.l.b16 %v73
  %v216 = vunpack.c.l.b16 %v74
  %v217 = vunpack.c.l.b16 %v75
  %v218 = vunpack.c.l.b16 %v76
  %v219 = vunpack.c.l.b16 %v77
  %v220 = vunpack.c.l.b16 %v78
  %v221 = vunpack.c.l.b16 %v79
  %v222 = vunpack.c.l.b16 %v80
  %v223 = vunpack.c.l.b16 %v81
  %v224 = vunpack.c.l.b16 %v82
  %v225 = vunpack.c.l.b16 %v83
  %v226 = vunpack.c.l.b16 %v84
  %v227 = vpack.c.b16 %v164, %v163
  %v228 = vpack.c.b16 %v166, %v165
  %v229 = vpack.c.b16 %v168, %v167
  %v230 = vpack.c.b16 %v170, %v169
  %v231 = vpack.c.b16 %v172, %v171
  %v232 = vpack.c.b16 %v174, %v173
  %v233 = vpack.c.b16 %v176, %v175
  %v234 = vpack.c.b16 %v178, %v177
  %v235 = vpack.c.b16 %v180, %v179
  %v236 = vpack.c.b16 %v182, %v181
  %v237 = vpack.c.b16 %v184, %v183
  %v238 = vpack.c.b16 %v186, %v185
  %v239 = vpack.c.b16 %v188, %v187
  %v240 = vpack.c.b16 %v190, %v189
  %v241 = vpack.c.b16 %v192, %v191
  %v242 = vpack.c.b16 %v194, %v193
  %v243 = vpack.c.b16 %v196, %v195
  %v244 = vpack.c.b16 %v198, %v197
  %v245 = vpack.c.b16 %v200, %v199
  %v246 = vpack.c.b16 %v202, %v201
  %v247 = vpack.c.b16 %v204, %v203
  %v248 = vpack.c.b16 %v206, %v205
  %v249 = vpack.c.b16 %v208, %v207
  %v250 = vpack.c.b16 %v210, %v209
  %v251 = vpack.c.b16 %v212, %v211
  %v252 = vpack.c.b16 %v214, %v213
  %v253 = vpack.c.b16 %v216, %v215
  %v254 = vpack.c.b16 %v218, %v217
  %v255 = vpack.c.b16 %v220, %v219
  %v256 = vpack.c.b16 %v222, %v221
  %v257 = vpack.c.b16 %v224, %v223
  %v258 = vpack.c.b16 %v226, %v225
  %291 = vmatpush.bf16.msra.mxu0 %v234
  %292 = vmatpush.bf16.msra.mxu0 %v233
  %293 = vmatpush.bf16.msra.mxu0 %v232
  %294 = vmatpush.bf16.msra.mxu0 %v231
  %295 = vmatpush.bf16.msra.mxu0 %v230
  %296 = vmatpush.bf16.msra.mxu0 %v229
  %297 = vmatpush.bf16.msra.mxu0 %v228
  %298 = vmatpush.bf16.msra.mxu0 %v227
  %299 = vmatmul.bf16.gmra.mxu0 %v91
  %v300 = vpop.f32.mrf.mxu0
  %v301 = vadd.f32 0.0, %v300
  %v302 = vpop.f32.mrf.mxu0
  %303 = vdwg.mxu0
  %304 = vmatpush.bf16.msra.mxu0 %v242
  %305 = vmatpush.bf16.msra.mxu0 %v241
  %306 = vmatpush.bf16.msra.mxu0 %v240
  %307 = vmatpush.bf16.msra.mxu0 %v239
  %308 = vmatpush.bf16.msra.mxu0 %v238
  %309 = vmatpush.bf16.msra.mxu0 %v237
  %310 = vmatpush.bf16.msra.mxu0 %v236
  %311 = vmatpush.bf16.msra.mxu0 %v235
  %312 = vmatmul.bf16.gmra.mxu0 %v92
  %v313 = vpop.f32.mrf.mxu0
  %v314 = vadd.f32 %v301, %v313
  %v315 = vpop.f32.mrf.mxu0
  %316 = vdwg.mxu0
  %317 = vmatpush.bf16.msra.mxu0 %v250
  %318 = vmatpush.bf16.msra.mxu0 %v249
  %319 = vmatpush.bf16.msra.mxu0 %v248
  %320 = vmatpush.bf16.msra.mxu0 %v247
  %321 = vmatpush.bf16.msra.mxu0 %v246
  %322 = vmatpush.bf16.msra.mxu0 %v245
  %323 = vmatpush.bf16.msra.mxu0 %v244
  %324 = vmatpush.bf16.msra.mxu0 %v243
  %325 = vmatmul.bf16.gmra.mxu0 %v93
  %v326 = vpop.f32.mrf.mxu0
  %v327 = vadd.f32 %v314, %v326
  %v328 = vpop.f32.mrf.mxu0
  %329 = vdwg.mxu0
  %330 = vmatpush.bf16.msra.mxu0 %v258
  %331 = vmatpush.bf16.msra.mxu0 %v257
  %332 = vmatpush.bf16.msra.mxu0 %v256
  %333 = vmatpush.bf16.msra.mxu0 %v255
  %334 = vmatpush.bf16.msra.mxu0 %v254
  %335 = vmatpush.bf16.msra.mxu0 %v253
  %336 = vmatpush.bf16.msra.mxu0 %v252
  %337 = vmatpush.bf16.msra.mxu0 %v251
  %338 = vmatmul.bf16.gmra.mxu0 %v94
  %v339 = vpop.f32.mrf.mxu0
  %v340 = vadd.f32 %v327, %v339
  %v341 = vpop.f32.mrf.mxu0
  %342 = vdwg.mxu0
  %v343 = vadd.f32 %v18, %v340
  %344 = vst [vmem:[#allocation2] sm:$0xff] %v343
  // Predicated region
  $region14: #{d_net64_forward.12} parent=0 // pred_check
    %p345 = pneg %p13
  $region15: #{d_net64_forward.12} parent=0 // pred_check_branch
    %347 = sbr.rel (%p345) target = $region17
  $region16: #{d_net64_forward.12} parent=0 // pred_region
    %v348 = vld [vmem:[#allocation2] sm:$0xff]
    %349 = vst [vmem:[%s2] sm:$0xff] %v348
    %v350 = vrot.slane %v348, 4
    %v351 = vadd.f32 %v348, %v350
    %v352 = vrot.slane %v351, 2
    %v353 = vadd.f32 %v351, %v352
    %v354 = vrot.slane %v353, 1
    %v355 = vadd.f32 %v353, %v354
    %v356 = vmul.f32 %v348, %v348
    %v357 = vrot.slane %v356, 4
    %v358 = vadd.f32 %v356, %v357
    %v359 = vrot.slane %v358, 2
    %v360 = vadd.f32 %v358, %v359
    %v361 = vrot.slane %v360, 1
    %v362 = vadd.f32 %v360, %v361
    %v363 = vlaneseq
    %v364 = vshrl.u32 %v363, 7
    %vm365 = vcmp.eq.s32.totalorder %v364, 0
    %vm366 = vcmp.eq.s32.totalorder %v364, 1
    %v367 = vsel %vm366, %v362, 0.0
    %v368 = vsel %vm365, %v355, %v367
    %369 = vst [vmem:[%s3] sm:$0xff] %v368
  $region17: #{d_net64_forward.12} parent=0 // pred_fallthru
    _
  // Predicated region
  $region18: #{d_net64_forward.12} parent=0 // pred_check
    _
  $region19: #{d_net64_forward.12} parent=0 // pred_check_branch
    %371 = sbr.rel (0) target = $region21
  $region20: #{d_net64_forward.12} parent=0 // pred_region
    _
  $region21: #{d_net64_forward.12} parent=0 // pred_fallthru
    _
  // Predicated region
  $region22: #{d_net64_forward.12} parent=0 // pred_check
    _
  $region23: #{d_net64_forward.12} parent=0 // pred_check_branch
    %373 = sbr.rel (0) target = $region25
  $region24: #{d_net64_forward.12} parent=0 // pred_region
    _
  $region25: #{d_net64_forward.12} parent=0 // pred_fallthru
    _
  // Predicated region
  $region26: #{d_net64_forward.12} parent=0 // pred_check
    _
  $region27: #{d_net64_forward.12} parent=0 // pred_check_branch
    %375 = sbr.rel (0) target = $region29
  $region28: #{d_net64_forward.12} parent=0 // pred_region
    _
  $region29: #{d_net64_forward.12} parent=0 // pred_fallthru
    _
  // Predicated region
  $region30: #{d_net64_forward.12} parent=0 // pred_check
    _
  $region31: #{d_net64_forward.12} parent=0 // pred_check_branch
    %377 = sbr.rel (0) target = $region33
  $region32: #{d_net64_forward.12} parent=0 // pred_region
    _
  $region33: #{d_net64_forward.12} parent=0 // pred_fallthru
    _

</llo_original>
